<compile_context>
chip_gen: v6e
topology: v6e:2x2x1
jax: 0.10.0
libtpu: 0.0.40
codegen_flags: <defaults>
</compile_context>

<pallas_src>
import functools
import math

import jax
import jax.numpy as jnp
from jax.experimental import pallas as pl
from jax.experimental.pallas import tpu as pltpu


# ----------------------------- config ---------------------------------------
class Cfg:
    vocab_size = 64
    hidden = 32
    num_heads = 4
    head_dim = 8          # hidden // num_heads
    ff = 64
    layers = 2
    max_pos = 66
    type_vocab = 2
    pad_idx = 1
    ln_eps = 1e-5
    init_std = 0.02


# ----------------------------- kernel ---------------------------------------
def _layernorm(x, g, b, eps):
    mu = jnp.mean(x, axis=-1, keepdims=True)
    xc = x - mu
    var = jnp.mean(xc * xc, axis=-1, keepdims=True)
    return xc * jax.lax.rsqrt(var + eps) * g + b


def bert_kernel(emb_ref, bias_ref, hm_ref, emb_g_ref, emb_b_ref,
                wq_ref, bq_ref, wk_ref, bk_ref, wv_ref, bv_ref,
                wo_ref, bo_ref, ln1_g_ref, ln1_b_ref,
                w1_ref, b1_ref, w2_ref, b2_ref, ln2_g_ref, ln2_b_ref,
                out_ref, *, B, S, H, nh, d, L, eps, scale):
    """Whole encoder stack, fully fused.  All refs are whole-array VMEM blocks.

    emb:  (B*S, H)            summed word+pos+type embeddings (f32)
    bias: (nh*B*S, B*S)       precomputed additive attention bias: key-padding
                              mask broadcast over heads/query rows plus a -1e9
                              cross-batch block mask (broadcasts fully hoisted).
    hm:   (nh*B*S, H)         per-head 0/1 column mask; row block g keeps only
                              columns [g*d, (g+1)*d).
    Per-layer weights are stacked on a leading L axis (matmul weights bf16,
    biases/LN params f32) and stay VMEM-resident across the unrolled layer
    loop; activations never touch HBM.
    """
    BS = B * S
    bf16 = jnp.bfloat16
    f32 = jnp.float32

    hm = hm_ref[...]            # loaded once, reused across layers
    bias = bias_ref[...]

    # embedding LayerNorm
    x = _layernorm(emb_ref[...], emb_g_ref[...], emb_b_ref[...], eps)   # (BS, H) f32

    for li in range(L):                      # L=2 -> static unroll (LLO-visible)
        xb = x.astype(bf16)
        # separate Q/K/V projections (at H=32 a fused QKV would force unaligned
        # lane slices at offsets 32/64; at H=768 fuse them — slices become
        # 128-aligned and free).
        q = (jnp.dot(xb, wq_ref[li], preferred_element_type=f32) + bq_ref[li]) * scale
        k = jnp.dot(xb, wk_ref[li], preferred_element_type=f32) + bk_ref[li]
        v = jnp.dot(xb, wv_ref[li], preferred_element_type=f32) + bv_ref[li]

        # ---- head-batched attention: 3 big matmuls for ALL batches & heads ----
        # Replicate q once per head (row-block, sublane-aligned copy — inherent
        # data movement feeding the head-batched matmul) and zero out the
        # columns outside each block's head.  scores[(g, r), r'] is then the
        # per-head-g score between token r and token r' (cross-batch pairs are
        # killed by the -1e9 block bias, so softmax stays exact per batch).
        q_rep = jnp.concatenate([q] * nh, axis=0)            # (nh*BS, H)
        qs = (q_rep * hm).astype(bf16)

        s = jax.lax.dot_general(qs, k.astype(bf16), (((1,), (1,)), ((), ())),
                                preferred_element_type=f32) + bias       # (nh*BS, BS)
        m = jnp.max(s, axis=-1, keepdims=True)
        p = jnp.exp(s - m)
        p = p * pl.reciprocal(jnp.sum(p, axis=-1, keepdims=True),
                              approx=True)                   # EUP divide (softmax stays f32)

        ctx = jnp.dot(p.astype(bf16), v.astype(bf16),
                      preferred_element_type=f32)             # (nh*BS, H)
        ctx = (ctx * hm).astype(bf16)                         # keep only head-g columns per block
        t = jnp.dot(ctx, wo_ref[li], preferred_element_type=f32)   # (nh*BS, H): ctx_g @ Wo[g*d:(g+1)*d]

        # output projection already applied per head-block; multi-head combine
        # = sum of the nh sublane-aligned row blocks (no concatenate, no scratch).
        attn = t[0:BS, :]
        for g in range(1, nh):
            attn = attn + t[g * BS:(g + 1) * BS, :]
        attn = attn + bo_ref[li]

        # ---- residual + LayerNorm (fused, f32) ----
        x = _layernorm(attn + x, ln1_g_ref[li], ln1_b_ref[li], eps)

        # ---- FFN: bf16 matmuls, f32 accum, GELU on EUP, residual + LN ----
        h1 = jnp.dot(x.astype(bf16), w1_ref[li], preferred_element_type=f32) + b1_ref[li]
        h1 = jax.nn.gelu(h1, approximate=True)       # tanh-GELU; <1e-3 vs erf-GELU
        ff = jnp.dot(h1.astype(bf16), w2_ref[li], preferred_element_type=f32) + b2_ref[li]
        x = _layernorm(ff + x, ln2_g_ref[li], ln2_b_ref[li], eps)

    # At H=32 the store is lane-masked (32/128 lanes); a (4,128) repack would
    # cost a lane-merging relayout larger than the store it saves.  At phobert
    # shapes (H=768 = 6x128) the output is naturally lane-dense — keep it so.
    out_ref[...] = x

    # TODO(synk): at real phobert-base shapes (H=768, S>=256, 12 layers) this
    # whole-model-in-VMEM design must become: a "parallel" grid axis over
    # >=256-row tiles of B*S (megacore on v7x), a trailing "arbitrary" layer
    # axis streaming bf16 per-layer weights with pl.Buffered(2-3) on w1/w2,
    # 128-multiple tiles on v5e / 256-multiple on v6e+v7x, and explicit
    # vmem_limit_bytes via pltpu.CompilerParams.


# ----------------------------- params ---------------------------------------
def init_params(key, cfg):
    H, F, L = cfg.hidden, cfg.ff, cfg.layers
    ks = iter(jax.random.split(key, 9))
    wdt = jnp.bfloat16   # matmul weights in bf16 (MXU-native, half VMEM footprint)

    def nrm(shape, dtype=jnp.float32):
        return (cfg.init_std * jax.random.normal(next(ks), shape, jnp.float32)).astype(dtype)

    return {
        "word_emb": nrm((cfg.vocab_size, H)),
        "pos_emb": nrm((cfg.max_pos, H)),
        "type_emb": nrm((cfg.type_vocab, H)),   # the re-inited nn.Embedding(2, H)
        "emb_ln_g": jnp.ones((1, H), jnp.float32),
        "emb_ln_b": jnp.zeros((1, H), jnp.float32),
        # per-layer weights stacked on a leading L axis (VMEM-resident in-kernel)
        "wq": nrm((L, H, H), wdt), "bq": jnp.zeros((L, 1, H), jnp.float32),
        "wk": nrm((L, H, H), wdt), "bk": jnp.zeros((L, 1, H), jnp.float32),
        "wv": nrm((L, H, H), wdt), "bv": jnp.zeros((L, 1, H), jnp.float32),
        "wo": nrm((L, H, H), wdt), "bo": jnp.zeros((L, 1, H), jnp.float32),
        "ln1_g": jnp.ones((L, 1, H), jnp.float32), "ln1_b": jnp.zeros((L, 1, H), jnp.float32),
        "w1": nrm((L, H, F), wdt), "b1": jnp.zeros((L, 1, F), jnp.float32),
        "w2": nrm((L, F, H), wdt), "b2": jnp.zeros((L, 1, H), jnp.float32),
        "ln2_g": jnp.ones((L, 1, H), jnp.float32), "ln2_b": jnp.zeros((L, 1, H), jnp.float32),
    }


# ----------------------------- forward ---------------------------------------
def bert_forward(params, input_ids, segs, mask, cfg):
    B, S = input_ids.shape
    H, nh, d, L = cfg.hidden, cfg.num_heads, cfg.head_dim, cfg.layers
    BS = B * S

    # --- embeddings (gathers are glue) ---
    pos_mask = (input_ids != cfg.pad_idx).astype(jnp.int32)   # RoBERTa-style positions
    position_ids = jnp.cumsum(pos_mask, axis=1) * pos_mask + cfg.pad_idx
    emb = (jnp.take(params["word_emb"], input_ids, axis=0)
           + jnp.take(params["pos_emb"], position_ids, axis=0)
           + jnp.take(params["type_emb"], segs, axis=0)).reshape(BS, H)

    # --- fully pre-broadcast additive attention bias (hoisted out of kernel) ---
    # rows are (head g, batch b, query i), cols are (batch b', key j):
    #   key-padding bias for b'==b, -1e9 for cross-batch pairs.
    key_bias = (1.0 - mask.astype(jnp.float32)) * -10000.0            # (B, S)
    cross = (1.0 - jnp.eye(B, dtype=jnp.float32)) * -1e9               # (B, B')
    bias_bbj = key_bias[None, :, :] + cross[:, :, None]                # (B, B', S)
    attn_bias = jnp.broadcast_to(bias_bbj[None, :, None, :, :],
                                 (nh, B, S, B, S)).reshape(nh * BS, BS)

    # --- per-head column mask for the head-stacked attention (precomputed) ---
    col_head = jnp.arange(H, dtype=jnp.int32) // d                     # (H,)
    hm_g = (jnp.arange(nh, dtype=jnp.int32)[:, None] == col_head[None, :]).astype(jnp.float32)
    head_mask = jnp.broadcast_to(hm_g[:, None, :], (nh, BS, H)).reshape(nh * BS, H)

    kern = functools.partial(bert_kernel, B=B, S=S, H=H, nh=nh, d=d, L=L,
                             eps=cfg.ln_eps, scale=1.0 / math.sqrt(d))

    args = (emb, attn_bias, head_mask,
            params["emb_ln_g"], params["emb_ln_b"],
            params["wq"], params["bq"], params["wk"], params["bk"],
            params["wv"], params["bv"], params["wo"], params["bo"],
            params["ln1_g"], params["ln1_b"], params["w1"], params["b1"],
            params["w2"], params["b2"], params["ln2_g"], params["ln2_b"])

    vmem_spec = pl.BlockSpec(memory_space=pltpu.MemorySpace.VMEM)
    out = pl.pallas_call(
        kern,
        out_shape=jax.ShapeDtypeStruct((BS, H), jnp.float32),
        in_specs=[vmem_spec] * len(args),
        out_specs=vmem_spec,
    )(*args)

    return out.reshape(B, S, H)   # top_vec


# ----------------------------- main ---------------------------------------
if __name__ == "__main__":
    cfg = Cfg()
    B, S = 2, 8

    key = jax.random.PRNGKey(0)
    k_param, k_ids, k_segs = jax.random.split(key, 3)

    params = init_params(k_param, cfg)

    input_ids = jax.random.randint(k_ids, (B, S), 2, cfg.vocab_size, dtype=jnp.int32)
    segs = jax.random.randint(k_segs, (B, S), 0, 2, dtype=jnp.int32)
    mask = jnp.ones((B, S), jnp.int32)
    # mask the last two tokens of the second sequence (and make them pad tokens)
    mask = mask.at[1, -2:].set(0)
    input_ids = input_ids.at[1, -2:].set(cfg.pad_idx)

    forward = jax.jit(functools.partial(bert_forward, cfg=cfg))
    top_vec = forward(params, input_ids, segs, mask)
    top_vec = jax.block_until_ready(top_vec)

    assert top_vec.shape == (B, S, cfg.hidden)
    assert bool(jnp.all(jnp.isfinite(top_vec)))
    print("KERNEL_OK")
</pallas_src>

<mosaic_0001>
module attributes {stable_mosaic.version = 11 : i64} {
  func.func @bert_kernel(%arg0: memref<16x32xf32, #tpu.memory_space<vmem>>, %arg1: memref<64x16xf32, #tpu.memory_space<vmem>>, %arg2: memref<64x32xf32, #tpu.memory_space<vmem>>, %arg3: memref<1x32xf32, #tpu.memory_space<vmem>>, %arg4: memref<1x32xf32, #tpu.memory_space<vmem>>, %arg5: memref<2x32x32xbf16, #tpu.memory_space<vmem>>, %arg6: memref<2x1x32xf32, #tpu.memory_space<vmem>>, %arg7: memref<2x32x32xbf16, #tpu.memory_space<vmem>>, %arg8: memref<2x1x32xf32, #tpu.memory_space<vmem>>, %arg9: memref<2x32x32xbf16, #tpu.memory_space<vmem>>, %arg10: memref<2x1x32xf32, #tpu.memory_space<vmem>>, %arg11: memref<2x32x32xbf16, #tpu.memory_space<vmem>>, %arg12: memref<2x1x32xf32, #tpu.memory_space<vmem>>, %arg13: memref<2x1x32xf32, #tpu.memory_space<vmem>>, %arg14: memref<2x1x32xf32, #tpu.memory_space<vmem>>, %arg15: memref<2x32x64xbf16, #tpu.memory_space<vmem>>, %arg16: memref<2x1x64xf32, #tpu.memory_space<vmem>>, %arg17: memref<2x64x32xbf16, #tpu.memory_space<vmem>>, %arg18: memref<2x1x32xf32, #tpu.memory_space<vmem>>, %arg19: memref<2x1x32xf32, #tpu.memory_space<vmem>>, %arg20: memref<2x1x32xf32, #tpu.memory_space<vmem>>, %arg21: memref<16x32xf32, #tpu.memory_space<vmem>>) attributes {dimension_semantics = [], scalar_prefetch = 0 : i64, scratch_operands = 0 : i64, tpu.core_type = #tpu.core_type<tc>} {
    %c0 = arith.constant 0 : index
    %c0_0 = arith.constant 0 : index
    %0 = vector.load %arg2[%c0, %c0_0] : memref<64x32xf32, #tpu.memory_space<vmem>>, vector<64x32xf32>
    %c0_1 = arith.constant 0 : index
    %c0_2 = arith.constant 0 : index
    %1 = vector.load %arg1[%c0_1, %c0_2] : memref<64x16xf32, #tpu.memory_space<vmem>>, vector<64x16xf32>
    %c0_3 = arith.constant 0 : index
    %c0_4 = arith.constant 0 : index
    %2 = vector.load %arg0[%c0_3, %c0_4] : memref<16x32xf32, #tpu.memory_space<vmem>>, vector<16x32xf32>
    %c0_5 = arith.constant 0 : index
    %c0_6 = arith.constant 0 : index
    %3 = vector.load %arg3[%c0_5, %c0_6] : memref<1x32xf32, #tpu.memory_space<vmem>>, vector<1x32xf32>
    %c0_7 = arith.constant 0 : index
    %c0_8 = arith.constant 0 : index
    %4 = vector.load %arg4[%c0_7, %c0_8] : memref<1x32xf32, #tpu.memory_space<vmem>>, vector<1x32xf32>
    %cst = arith.constant dense<0.000000e+00> : vector<16xf32>
    %5 = vector.multi_reduction <add>, %2, %cst [1] : vector<16x32xf32> to vector<16xf32>
    %6 = vector.shape_cast %5 : vector<16xf32> to vector<16x1xf32>
    %cst_9 = arith.constant 3.200000e+01 : f32
    %7 = vector.broadcast %cst_9 : f32 to vector<16x1xf32>
    %8 = arith.divf %6, %7 : vector<16x1xf32>
    %9 = vector.broadcast %8 : vector<16x1xf32> to vector<16x32xf32>
    %10 = arith.subf %2, %9 : vector<16x32xf32>
    %11 = arith.mulf %10, %10 : vector<16x32xf32>
    %cst_10 = arith.constant dense<0.000000e+00> : vector<16xf32>
    %12 = vector.multi_reduction <add>, %11, %cst_10 [1] : vector<16x32xf32> to vector<16xf32>
    %13 = vector.shape_cast %12 : vector<16xf32> to vector<16x1xf32>
    %cst_11 = arith.constant 3.200000e+01 : f32
    %14 = vector.broadcast %cst_11 : f32 to vector<16x1xf32>
    %15 = arith.divf %13, %14 : vector<16x1xf32>
    %cst_12 = arith.constant 9.99999974E-6 : f32
    %16 = vector.broadcast %cst_12 : f32 to vector<16x1xf32>
    %17 = arith.addf %15, %16 : vector<16x1xf32>
    %18 = math.rsqrt %17 : vector<16x1xf32>
    %19 = vector.broadcast %18 : vector<16x1xf32> to vector<16x32xf32>
    %20 = arith.mulf %10, %19 : vector<16x32xf32>
    %21 = vector.broadcast %3 : vector<1x32xf32> to vector<16x32xf32>
    %22 = arith.mulf %20, %21 : vector<16x32xf32>
    %23 = vector.broadcast %4 : vector<1x32xf32> to vector<16x32xf32>
    %24 = arith.addf %22, %23 : vector<16x32xf32>
    %25 = arith.truncf %24 : vector<16x32xf32> to vector<16x32xbf16>
    %c0_13 = arith.constant 0 : index
    %c0_14 = arith.constant 0 : index
    %c0_15 = arith.constant 0 : index
    %26 = vector.load %arg5[%c0_13, %c0_14, %c0_15] : memref<2x32x32xbf16, #tpu.memory_space<vmem>>, vector<1x32x32xbf16>
    %27 = vector.shape_cast %26 : vector<1x32x32xbf16> to vector<32x32xbf16>
    %cst_16 = arith.constant dense<0.000000e+00> : vector<16x32xf32>
    %28 = tpu.matmul %25, %27, %cst_16 {dimension_numbers = #tpu.dot_dimension_numbers<[1], [0], [0], [1], [0, 0, 1, 1], [], []>} : vector<16x32xbf16>, vector<32x32xbf16>, vector<16x32xf32> -> vector<16x32xf32>
    %c0_17 = arith.constant 0 : index
    %c0_18 = arith.constant 0 : index
    %c0_19 = arith.constant 0 : index
    %29 = vector.load %arg6[%c0_17, %c0_18, %c0_19] : memref<2x1x32xf32, #tpu.memory_space<vmem>>, vector<1x1x32xf32>
    %30 = vector.shape_cast %29 : vector<1x1x32xf32> to vector<1x32xf32>
    %31 = vector.broadcast %30 : vector<1x32xf32> to vector<16x32xf32>
    %32 = arith.addf %28, %31 : vector<16x32xf32>
    %cst_20 = arith.constant 0.353553385 : f32
    %33 = vector.broadcast %cst_20 : f32 to vector<16x32xf32>
    %34 = arith.mulf %32, %33 : vector<16x32xf32>
    %c0_21 = arith.constant 0 : index
    %c0_22 = arith.constant 0 : index
    %c0_23 = arith.constant 0 : index
    %35 = vector.load %arg7[%c0_21, %c0_22, %c0_23] : memref<2x32x32xbf16, #tpu.memory_space<vmem>>, vector<1x32x32xbf16>
    %36 = vector.shape_cast %35 : vector<1x32x32xbf16> to vector<32x32xbf16>
    %cst_24 = arith.constant dense<0.000000e+00> : vector<16x32xf32>
    %37 = tpu.matmul %25, %36, %cst_24 {dimension_numbers = #tpu.dot_dimension_numbers<[1], [0], [0], [1], [0, 0, 1, 1], [], []>} : vector<16x32xbf16>, vector<32x32xbf16>, vector<16x32xf32> -> vector<16x32xf32>
    %c0_25 = arith.constant 0 : index
    %c0_26 = arith.constant 0 : index
    %c0_27 = arith.constant 0 : index
    %38 = vector.load %arg8[%c0_25, %c0_26, %c0_27] : memref<2x1x32xf32, #tpu.memory_space<vmem>>, vector<1x1x32xf32>
    %39 = vector.shape_cast %38 : vector<1x1x32xf32> to vector<1x32xf32>
    %40 = vector.broadcast %39 : vector<1x32xf32> to vector<16x32xf32>
    %41 = arith.addf %37, %40 : vector<16x32xf32>
    %c0_28 = arith.constant 0 : index
    %c0_29 = arith.constant 0 : index
    %c0_30 = arith.constant 0 : index
    %42 = vector.load %arg9[%c0_28, %c0_29, %c0_30] : memref<2x32x32xbf16, #tpu.memory_space<vmem>>, vector<1x32x32xbf16>
    %43 = vector.shape_cast %42 : vector<1x32x32xbf16> to vector<32x32xbf16>
    %cst_31 = arith.constant dense<0.000000e+00> : vector<16x32xf32>
    %44 = tpu.matmul %25, %43, %cst_31 {dimension_numbers = #tpu.dot_dimension_numbers<[1], [0], [0], [1], [0, 0, 1, 1], [], []>} : vector<16x32xbf16>, vector<32x32xbf16>, vector<16x32xf32> -> vector<16x32xf32>
    %c0_32 = arith.constant 0 : index
    %c0_33 = arith.constant 0 : index
    %c0_34 = arith.constant 0 : index
    %45 = vector.load %arg10[%c0_32, %c0_33, %c0_34] : memref<2x1x32xf32, #tpu.memory_space<vmem>>, vector<1x1x32xf32>
    %46 = vector.shape_cast %45 : vector<1x1x32xf32> to vector<1x32xf32>
    %47 = vector.broadcast %46 : vector<1x32xf32> to vector<16x32xf32>
    %48 = arith.addf %44, %47 : vector<16x32xf32>
    %49 = tpu.concatenate %34, %34, %34, %34 in 0 : vector<16x32xf32>, vector<16x32xf32>, vector<16x32xf32>, vector<16x32xf32> -> vector<64x32xf32>
    %50 = arith.mulf %49, %0 : vector<64x32xf32>
    %51 = arith.truncf %50 : vector<64x32xf32> to vector<64x32xbf16>
    %52 = arith.truncf %41 : vector<16x32xf32> to vector<16x32xbf16>
    %cst_35 = arith.constant dense<0.000000e+00> : vector<64x16xf32>
    %53 = tpu.matmul %51, %52, %cst_35 {dimension_numbers = #tpu.dot_dimension_numbers<[1], [1], [0], [0], [0, 0, 1, 0], [], []>} : vector<64x32xbf16>, vector<16x32xbf16>, vector<64x16xf32> -> vector<64x16xf32>
    %54 = arith.addf %53, %1 : vector<64x16xf32>
    %cst_36 = arith.constant dense<0xFF800000> : vector<64xf32>
    %55 = vector.multi_reduction <maximumf>, %54, %cst_36 [1] : vector<64x16xf32> to vector<64xf32>
    %56 = vector.shape_cast %55 : vector<64xf32> to vector<64x1xf32>
    %57 = vector.broadcast %56 : vector<64x1xf32> to vector<64x16xf32>
    %58 = arith.subf %54, %57 : vector<64x16xf32>
    %59 = math.exp %58 : vector<64x16xf32>
    %cst_37 = arith.constant dense<0.000000e+00> : vector<64xf32>
    %60 = vector.multi_reduction <add>, %59, %cst_37 [1] : vector<64x16xf32> to vector<64xf32>
    %61 = vector.shape_cast %60 : vector<64xf32> to vector<64x1xf32>
    %62 = tpu.reciprocal %61 {approx = true} : vector<64x1xf32> -> vector<64x1xf32>
    %63 = vector.broadcast %62 : vector<64x1xf32> to vector<64x16xf32>
    %64 = arith.mulf %59, %63 : vector<64x16xf32>
    %65 = arith.truncf %64 : vector<64x16xf32> to vector<64x16xbf16>
    %66 = arith.truncf %48 : vector<16x32xf32> to vector<16x32xbf16>
    %cst_38 = arith.constant dense<0.000000e+00> : vector<64x32xf32>
    %67 = tpu.matmul %65, %66, %cst_38 {dimension_numbers = #tpu.dot_dimension_numbers<[1], [0], [0], [1], [0, 0, 1, 1], [], []>} : vector<64x16xbf16>, vector<16x32xbf16>, vector<64x32xf32> -> vector<64x32xf32>
    %68 = arith.mulf %67, %0 : vector<64x32xf32>
    %69 = arith.truncf %68 : vector<64x32xf32> to vector<64x32xbf16>
    %c0_39 = arith.constant 0 : index
    %c0_40 = arith.constant 0 : index
    %c0_41 = arith.constant 0 : index
    %70 = vector.load %arg11[%c0_39, %c0_40, %c0_41] : memref<2x32x32xbf16, #tpu.memory_space<vmem>>, vector<1x32x32xbf16>
    %71 = vector.shape_cast %70 : vector<1x32x32xbf16> to vector<32x32xbf16>
    %cst_42 = arith.constant dense<0.000000e+00> : vector<64x32xf32>
    %72 = tpu.matmul %69, %71, %cst_42 {dimension_numbers = #tpu.dot_dimension_numbers<[1], [0], [0], [1], [0, 0, 1, 1], [], []>} : vector<64x32xbf16>, vector<32x32xbf16>, vector<64x32xf32> -> vector<64x32xf32>
    %73 = vector.extract_strided_slice %72 {offsets = [0, 0], sizes = [16, 32], strides = [1, 1]} : vector<64x32xf32> to vector<16x32xf32>
    %74 = vector.extract_strided_slice %72 {offsets = [16, 0], sizes = [16, 32], strides = [1, 1]} : vector<64x32xf32> to vector<16x32xf32>
    %75 = arith.addf %73, %74 : vector<16x32xf32>
    %76 = vector.extract_strided_slice %72 {offsets = [32, 0], sizes = [16, 32], strides = [1, 1]} : vector<64x32xf32> to vector<16x32xf32>
    %77 = arith.addf %75, %76 : vector<16x32xf32>
    %78 = vector.extract_strided_slice %72 {offsets = [48, 0], sizes = [16, 32], strides = [1, 1]} : vector<64x32xf32> to vector<16x32xf32>
    %79 = arith.addf %77, %78 : vector<16x32xf32>
    %c0_43 = arith.constant 0 : index
    %c0_44 = arith.constant 0 : index
    %c0_45 = arith.constant 0 : index
    %80 = vector.load %arg12[%c0_43, %c0_44, %c0_45] : memref<2x1x32xf32, #tpu.memory_space<vmem>>, vector<1x1x32xf32>
    %81 = vector.shape_cast %80 : vector<1x1x32xf32> to vector<1x32xf32>
    %82 = vector.broadcast %81 : vector<1x32xf32> to vector<16x32xf32>
    %83 = arith.addf %79, %82 : vector<16x32xf32>
    %84 = arith.addf %83, %24 : vector<16x32xf32>
    %c0_46 = arith.constant 0 : index
    %c0_47 = arith.constant 0 : index
    %c0_48 = arith.constant 0 : index
    %85 = vector.load %arg13[%c0_46, %c0_47, %c0_48] : memref<2x1x32xf32, #tpu.memory_space<vmem>>, vector<1x1x32xf32>
    %86 = vector.shape_cast %85 : vector<1x1x32xf32> to vector<1x32xf32>
    %c0_49 = arith.constant 0 : index
    %c0_50 = arith.constant 0 : index
    %c0_51 = arith.constant 0 : index
    %87 = vector.load %arg14[%c0_49, %c0_50, %c0_51] : memref<2x1x32xf32, #tpu.memory_space<vmem>>, vector<1x1x32xf32>
    %88 = vector.shape_cast %87 : vector<1x1x32xf32> to vector<1x32xf32>
    %cst_52 = arith.constant dense<0.000000e+00> : vector<16xf32>
    %89 = vector.multi_reduction <add>, %84, %cst_52 [1] : vector<16x32xf32> to vector<16xf32>
    %90 = vector.shape_cast %89 : vector<16xf32> to vector<16x1xf32>
    %cst_53 = arith.constant 3.200000e+01 : f32
    %91 = vector.broadcast %cst_53 : f32 to vector<16x1xf32>
    %92 = arith.divf %90, %91 : vector<16x1xf32>
    %93 = vector.broadcast %92 : vector<16x1xf32> to vector<16x32xf32>
    %94 = arith.subf %84, %93 : vector<16x32xf32>
    %95 = arith.mulf %94, %94 : vector<16x32xf32>
    %cst_54 = arith.constant dense<0.000000e+00> : vector<16xf32>
    %96 = vector.multi_reduction <add>, %95, %cst_54 [1] : vector<16x32xf32> to vector<16xf32>
    %97 = vector.shape_cast %96 : vector<16xf32> to vector<16x1xf32>
    %cst_55 = arith.constant 3.200000e+01 : f32
    %98 = vector.broadcast %cst_55 : f32 to vector<16x1xf32>
    %99 = arith.divf %97, %98 : vector<16x1xf32>
    %cst_56 = arith.constant 9.99999974E-6 : f32
    %100 = vector.broadcast %cst_56 : f32 to vector<16x1xf32>
    %101 = arith.addf %99, %100 : vector<16x1xf32>
    %102 = math.rsqrt %101 : vector<16x1xf32>
    %103 = vector.broadcast %102 : vector<16x1xf32> to vector<16x32xf32>
    %104 = arith.mulf %94, %103 : vector<16x32xf32>
    %105 = vector.broadcast %86 : vector<1x32xf32> to vector<16x32xf32>
    %106 = arith.mulf %104, %105 : vector<16x32xf32>
    %107 = vector.broadcast %88 : vector<1x32xf32> to vector<16x32xf32>
    %108 = arith.addf %106, %107 : vector<16x32xf32>
    %109 = arith.truncf %108 : vector<16x32xf32> to vector<16x32xbf16>
    %c0_57 = arith.constant 0 : index
    %c0_58 = arith.constant 0 : index
    %c0_59 = arith.constant 0 : index
    %110 = vector.load %arg15[%c0_57, %c0_58, %c0_59] : memref<2x32x64xbf16, #tpu.memory_space<vmem>>, vector<1x32x64xbf16>
    %111 = vector.shape_cast %110 : vector<1x32x64xbf16> to vector<32x64xbf16>
    %cst_60 = arith.constant dense<0.000000e+00> : vector<16x64xf32>
    %112 = tpu.matmul %109, %111, %cst_60 {dimension_numbers = #tpu.dot_dimension_numbers<[1], [0], [0], [1], [0, 0, 1, 1], [], []>} : vector<16x32xbf16>, vector<32x64xbf16>, vector<16x64xf32> -> vector<16x64xf32>
    %c0_61 = arith.constant 0 : index
    %c0_62 = arith.constant 0 : index
    %c0_63 = arith.constant 0 : index
    %113 = vector.load %arg16[%c0_61, %c0_62, %c0_63] : memref<2x1x64xf32, #tpu.memory_space<vmem>>, vector<1x1x64xf32>
    %114 = vector.shape_cast %113 : vector<1x1x64xf32> to vector<1x64xf32>
    %115 = vector.broadcast %114 : vector<1x64xf32> to vector<16x64xf32>
    %116 = arith.addf %112, %115 : vector<16x64xf32>
    %117 = arith.mulf %116, %116 : vector<16x64xf32>
    %118 = arith.mulf %116, %117 : vector<16x64xf32>
    %cst_64 = arith.constant 4.471500e-02 : f32
    %119 = vector.broadcast %cst_64 : f32 to vector<16x64xf32>
    %120 = arith.mulf %119, %118 : vector<16x64xf32>
    %121 = arith.addf %116, %120 : vector<16x64xf32>
    %cst_65 = arith.constant 0.797884583 : f32
    %122 = vector.broadcast %cst_65 : f32 to vector<16x64xf32>
    %123 = arith.mulf %122, %121 : vector<16x64xf32>
    %124 = math.tanh %123 : vector<16x64xf32>
    %cst_66 = arith.constant 1.000000e+00 : f32
    %125 = vector.broadcast %cst_66 : f32 to vector<16x64xf32>
    %126 = arith.addf %125, %124 : vector<16x64xf32>
    %cst_67 = arith.constant 5.000000e-01 : f32
    %127 = vector.broadcast %cst_67 : f32 to vector<16x64xf32>
    %128 = arith.mulf %127, %126 : vector<16x64xf32>
    %129 = arith.mulf %116, %128 : vector<16x64xf32>
    %130 = arith.truncf %129 : vector<16x64xf32> to vector<16x64xbf16>
    %c0_68 = arith.constant 0 : index
    %c0_69 = arith.constant 0 : index
    %c0_70 = arith.constant 0 : index
    %131 = vector.load %arg17[%c0_68, %c0_69, %c0_70] : memref<2x64x32xbf16, #tpu.memory_space<vmem>>, vector<1x64x32xbf16>
    %132 = vector.shape_cast %131 : vector<1x64x32xbf16> to vector<64x32xbf16>
    %cst_71 = arith.constant dense<0.000000e+00> : vector<16x32xf32>
    %133 = tpu.matmul %130, %132, %cst_71 {dimension_numbers = #tpu.dot_dimension_numbers<[1], [0], [0], [1], [0, 0, 1, 1], [], []>} : vector<16x64xbf16>, vector<64x32xbf16>, vector<16x32xf32> -> vector<16x32xf32>
    %c0_72 = arith.constant 0 : index
    %c0_73 = arith.constant 0 : index
    %c0_74 = arith.constant 0 : index
    %134 = vector.load %arg18[%c0_72, %c0_73, %c0_74] : memref<2x1x32xf32, #tpu.memory_space<vmem>>, vector<1x1x32xf32>
    %135 = vector.shape_cast %134 : vector<1x1x32xf32> to vector<1x32xf32>
    %136 = vector.broadcast %135 : vector<1x32xf32> to vector<16x32xf32>
    %137 = arith.addf %133, %136 : vector<16x32xf32>
    %138 = arith.addf %137, %108 : vector<16x32xf32>
    %c0_75 = arith.constant 0 : index
    %c0_76 = arith.constant 0 : index
    %c0_77 = arith.constant 0 : index
    %139 = vector.load %arg19[%c0_75, %c0_76, %c0_77] : memref<2x1x32xf32, #tpu.memory_space<vmem>>, vector<1x1x32xf32>
    %140 = vector.shape_cast %139 : vector<1x1x32xf32> to vector<1x32xf32>
    %c0_78 = arith.constant 0 : index
    %c0_79 = arith.constant 0 : index
    %c0_80 = arith.constant 0 : index
    %141 = vector.load %arg20[%c0_78, %c0_79, %c0_80] : memref<2x1x32xf32, #tpu.memory_space<vmem>>, vector<1x1x32xf32>
    %142 = vector.shape_cast %141 : vector<1x1x32xf32> to vector<1x32xf32>
    %cst_81 = arith.constant dense<0.000000e+00> : vector<16xf32>
    %143 = vector.multi_reduction <add>, %138, %cst_81 [1] : vector<16x32xf32> to vector<16xf32>
    %144 = vector.shape_cast %143 : vector<16xf32> to vector<16x1xf32>
    %cst_82 = arith.constant 3.200000e+01 : f32
    %145 = vector.broadcast %cst_82 : f32 to vector<16x1xf32>
    %146 = arith.divf %144, %145 : vector<16x1xf32>
    %147 = vector.broadcast %146 : vector<16x1xf32> to vector<16x32xf32>
    %148 = arith.subf %138, %147 : vector<16x32xf32>
    %149 = arith.mulf %148, %148 : vector<16x32xf32>
    %cst_83 = arith.constant dense<0.000000e+00> : vector<16xf32>
    %150 = vector.multi_reduction <add>, %149, %cst_83 [1] : vector<16x32xf32> to vector<16xf32>
    %151 = vector.shape_cast %150 : vector<16xf32> to vector<16x1xf32>
    %cst_84 = arith.constant 3.200000e+01 : f32
    %152 = vector.broadcast %cst_84 : f32 to vector<16x1xf32>
    %153 = arith.divf %151, %152 : vector<16x1xf32>
    %cst_85 = arith.constant 9.99999974E-6 : f32
    %154 = vector.broadcast %cst_85 : f32 to vector<16x1xf32>
    %155 = arith.addf %153, %154 : vector<16x1xf32>
    %156 = math.rsqrt %155 : vector<16x1xf32>
    %157 = vector.broadcast %156 : vector<16x1xf32> to vector<16x32xf32>
    %158 = arith.mulf %148, %157 : vector<16x32xf32>
    %159 = vector.broadcast %140 : vector<1x32xf32> to vector<16x32xf32>
    %160 = arith.mulf %158, %159 : vector<16x32xf32>
    %161 = vector.broadcast %142 : vector<1x32xf32> to vector<16x32xf32>
    %162 = arith.addf %160, %161 : vector<16x32xf32>
    %163 = arith.truncf %162 : vector<16x32xf32> to vector<16x32xbf16>
    %c1 = arith.constant 1 : index
    %c0_86 = arith.constant 0 : index
    %c0_87 = arith.constant 0 : index
    %164 = vector.load %arg5[%c1, %c0_86, %c0_87] : memref<2x32x32xbf16, #tpu.memory_space<vmem>>, vector<1x32x32xbf16>
    %165 = vector.shape_cast %164 : vector<1x32x32xbf16> to vector<32x32xbf16>
    %cst_88 = arith.constant dense<0.000000e+00> : vector<16x32xf32>
    %166 = tpu.matmul %163, %165, %cst_88 {dimension_numbers = #tpu.dot_dimension_numbers<[1], [0], [0], [1], [0, 0, 1, 1], [], []>} : vector<16x32xbf16>, vector<32x32xbf16>, vector<16x32xf32> -> vector<16x32xf32>
    %c1_89 = arith.constant 1 : index
    %c0_90 = arith.constant 0 : index
    %c0_91 = arith.constant 0 : index
    %167 = vector.load %arg6[%c1_89, %c0_90, %c0_91] : memref<2x1x32xf32, #tpu.memory_space<vmem>>, vector<1x1x32xf32>
    %168 = vector.shape_cast %167 : vector<1x1x32xf32> to vector<1x32xf32>
    %169 = vector.broadcast %168 : vector<1x32xf32> to vector<16x32xf32>
    %170 = arith.addf %166, %169 : vector<16x32xf32>
    %cst_92 = arith.constant 0.353553385 : f32
    %171 = vector.broadcast %cst_92 : f32 to vector<16x32xf32>
    %172 = arith.mulf %170, %171 : vector<16x32xf32>
    %c1_93 = arith.constant 1 : index
    %c0_94 = arith.constant 0 : index
    %c0_95 = arith.constant 0 : index
    %173 = vector.load %arg7[%c1_93, %c0_94, %c0_95] : memref<2x32x32xbf16, #tpu.memory_space<vmem>>, vector<1x32x32xbf16>
    %174 = vector.shape_cast %173 : vector<1x32x32xbf16> to vector<32x32xbf16>
    %cst_96 = arith.constant dense<0.000000e+00> : vector<16x32xf32>
    %175 = tpu.matmul %163, %174, %cst_96 {dimension_numbers = #tpu.dot_dimension_numbers<[1], [0], [0], [1], [0, 0, 1, 1], [], []>} : vector<16x32xbf16>, vector<32x32xbf16>, vector<16x32xf32> -> vector<16x32xf32>
    %c1_97 = arith.constant 1 : index
    %c0_98 = arith.constant 0 : index
    %c0_99 = arith.constant 0 : index
    %176 = vector.load %arg8[%c1_97, %c0_98, %c0_99] : memref<2x1x32xf32, #tpu.memory_space<vmem>>, vector<1x1x32xf32>
    %177 = vector.shape_cast %176 : vector<1x1x32xf32> to vector<1x32xf32>
    %178 = vector.broadcast %177 : vector<1x32xf32> to vector<16x32xf32>
    %179 = arith.addf %175, %178 : vector<16x32xf32>
    %c1_100 = arith.constant 1 : index
    %c0_101 = arith.constant 0 : index
    %c0_102 = arith.constant 0 : index
    %180 = vector.load %arg9[%c1_100, %c0_101, %c0_102] : memref<2x32x32xbf16, #tpu.memory_space<vmem>>, vector<1x32x32xbf16>
    %181 = vector.shape_cast %180 : vector<1x32x32xbf16> to vector<32x32xbf16>
    %cst_103 = arith.constant dense<0.000000e+00> : vector<16x32xf32>
    %182 = tpu.matmul %163, %181, %cst_103 {dimension_numbers = #tpu.dot_dimension_numbers<[1], [0], [0], [1], [0, 0, 1, 1], [], []>} : vector<16x32xbf16>, vector<32x32xbf16>, vector<16x32xf32> -> vector<16x32xf32>
    %c1_104 = arith.constant 1 : index
    %c0_105 = arith.constant 0 : index
    %c0_106 = arith.constant 0 : index
    %183 = vector.load %arg10[%c1_104, %c0_105, %c0_106] : memref<2x1x32xf32, #tpu.memory_space<vmem>>, vector<1x1x32xf32>
    %184 = vector.shape_cast %183 : vector<1x1x32xf32> to vector<1x32xf32>
    %185 = vector.broadcast %184 : vector<1x32xf32> to vector<16x32xf32>
    %186 = arith.addf %182, %185 : vector<16x32xf32>
    %187 = tpu.concatenate %172, %172, %172, %172 in 0 : vector<16x32xf32>, vector<16x32xf32>, vector<16x32xf32>, vector<16x32xf32> -> vector<64x32xf32>
    %188 = arith.mulf %187, %0 : vector<64x32xf32>
    %189 = arith.truncf %188 : vector<64x32xf32> to vector<64x32xbf16>
    %190 = arith.truncf %179 : vector<16x32xf32> to vector<16x32xbf16>
    %cst_107 = arith.constant dense<0.000000e+00> : vector<64x16xf32>
    %191 = tpu.matmul %189, %190, %cst_107 {dimension_numbers = #tpu.dot_dimension_numbers<[1], [1], [0], [0], [0, 0, 1, 0], [], []>} : vector<64x32xbf16>, vector<16x32xbf16>, vector<64x16xf32> -> vector<64x16xf32>
    %192 = arith.addf %191, %1 : vector<64x16xf32>
    %cst_108 = arith.constant dense<0xFF800000> : vector<64xf32>
    %193 = vector.multi_reduction <maximumf>, %192, %cst_108 [1] : vector<64x16xf32> to vector<64xf32>
    %194 = vector.shape_cast %193 : vector<64xf32> to vector<64x1xf32>
    %195 = vector.broadcast %194 : vector<64x1xf32> to vector<64x16xf32>
    %196 = arith.subf %192, %195 : vector<64x16xf32>
    %197 = math.exp %196 : vector<64x16xf32>
    %cst_109 = arith.constant dense<0.000000e+00> : vector<64xf32>
    %198 = vector.multi_reduction <add>, %197, %cst_109 [1] : vector<64x16xf32> to vector<64xf32>
    %199 = vector.shape_cast %198 : vector<64xf32> to vector<64x1xf32>
    %200 = tpu.reciprocal %199 {approx = true} : vector<64x1xf32> -> vector<64x1xf32>
    %201 = vector.broadcast %200 : vector<64x1xf32> to vector<64x16xf32>
    %202 = arith.mulf %197, %201 : vector<64x16xf32>
    %203 = arith.truncf %202 : vector<64x16xf32> to vector<64x16xbf16>
    %204 = arith.truncf %186 : vector<16x32xf32> to vector<16x32xbf16>
    %cst_110 = arith.constant dense<0.000000e+00> : vector<64x32xf32>
    %205 = tpu.matmul %203, %204, %cst_110 {dimension_numbers = #tpu.dot_dimension_numbers<[1], [0], [0], [1], [0, 0, 1, 1], [], []>} : vector<64x16xbf16>, vector<16x32xbf16>, vector<64x32xf32> -> vector<64x32xf32>
    %206 = arith.mulf %205, %0 : vector<64x32xf32>
    %207 = arith.truncf %206 : vector<64x32xf32> to vector<64x32xbf16>
    %c1_111 = arith.constant 1 : index
    %c0_112 = arith.constant 0 : index
    %c0_113 = arith.constant 0 : index
    %208 = vector.load %arg11[%c1_111, %c0_112, %c0_113] : memref<2x32x32xbf16, #tpu.memory_space<vmem>>, vector<1x32x32xbf16>
    %209 = vector.shape_cast %208 : vector<1x32x32xbf16> to vector<32x32xbf16>
    %cst_114 = arith.constant dense<0.000000e+00> : vector<64x32xf32>
    %210 = tpu.matmul %207, %209, %cst_114 {dimension_numbers = #tpu.dot_dimension_numbers<[1], [0], [0], [1], [0, 0, 1, 1], [], []>} : vector<64x32xbf16>, vector<32x32xbf16>, vector<64x32xf32> -> vector<64x32xf32>
    %211 = vector.extract_strided_slice %210 {offsets = [0, 0], sizes = [16, 32], strides = [1, 1]} : vector<64x32xf32> to vector<16x32xf32>
    %212 = vector.extract_strided_slice %210 {offsets = [16, 0], sizes = [16, 32], strides = [1, 1]} : vector<64x32xf32> to vector<16x32xf32>
    %213 = arith.addf %211, %212 : vector<16x32xf32>
    %214 = vector.extract_strided_slice %210 {offsets = [32, 0], sizes = [16, 32], strides = [1, 1]} : vector<64x32xf32> to vector<16x32xf32>
    %215 = arith.addf %213, %214 : vector<16x32xf32>
    %216 = vector.extract_strided_slice %210 {offsets = [48, 0], sizes = [16, 32], strides = [1, 1]} : vector<64x32xf32> to vector<16x32xf32>
    %217 = arith.addf %215, %216 : vector<16x32xf32>
    %c1_115 = arith.constant 1 : index
    %c0_116 = arith.constant 0 : index
    %c0_117 = arith.constant 0 : index
    %218 = vector.load %arg12[%c1_115, %c0_116, %c0_117] : memref<2x1x32xf32, #tpu.memory_space<vmem>>, vector<1x1x32xf32>
    %219 = vector.shape_cast %218 : vector<1x1x32xf32> to vector<1x32xf32>
    %220 = vector.broadcast %219 : vector<1x32xf32> to vector<16x32xf32>
    %221 = arith.addf %217, %220 : vector<16x32xf32>
    %222 = arith.addf %221, %162 : vector<16x32xf32>
    %c1_118 = arith.constant 1 : index
    %c0_119 = arith.constant 0 : index
    %c0_120 = arith.constant 0 : index
    %223 = vector.load %arg13[%c1_118, %c0_119, %c0_120] : memref<2x1x32xf32, #tpu.memory_space<vmem>>, vector<1x1x32xf32>
    %224 = vector.shape_cast %223 : vector<1x1x32xf32> to vector<1x32xf32>
    %c1_121 = arith.constant 1 : index
    %c0_122 = arith.constant 0 : index
    %c0_123 = arith.constant 0 : index
    %225 = vector.load %arg14[%c1_121, %c0_122, %c0_123] : memref<2x1x32xf32, #tpu.memory_space<vmem>>, vector<1x1x32xf32>
    %226 = vector.shape_cast %225 : vector<1x1x32xf32> to vector<1x32xf32>
    %cst_124 = arith.constant dense<0.000000e+00> : vector<16xf32>
    %227 = vector.multi_reduction <add>, %222, %cst_124 [1] : vector<16x32xf32> to vector<16xf32>
    %228 = vector.shape_cast %227 : vector<16xf32> to vector<16x1xf32>
    %cst_125 = arith.constant 3.200000e+01 : f32
    %229 = vector.broadcast %cst_125 : f32 to vector<16x1xf32>
    %230 = arith.divf %228, %229 : vector<16x1xf32>
    %231 = vector.broadcast %230 : vector<16x1xf32> to vector<16x32xf32>
    %232 = arith.subf %222, %231 : vector<16x32xf32>
    %233 = arith.mulf %232, %232 : vector<16x32xf32>
    %cst_126 = arith.constant dense<0.000000e+00> : vector<16xf32>
    %234 = vector.multi_reduction <add>, %233, %cst_126 [1] : vector<16x32xf32> to vector<16xf32>
    %235 = vector.shape_cast %234 : vector<16xf32> to vector<16x1xf32>
    %cst_127 = arith.constant 3.200000e+01 : f32
    %236 = vector.broadcast %cst_127 : f32 to vector<16x1xf32>
    %237 = arith.divf %235, %236 : vector<16x1xf32>
    %cst_128 = arith.constant 9.99999974E-6 : f32
    %238 = vector.broadcast %cst_128 : f32 to vector<16x1xf32>
    %239 = arith.addf %237, %238 : vector<16x1xf32>
    %240 = math.rsqrt %239 : vector<16x1xf32>
    %241 = vector.broadcast %240 : vector<16x1xf32> to vector<16x32xf32>
    %242 = arith.mulf %232, %241 : vector<16x32xf32>
    %243 = vector.broadcast %224 : vector<1x32xf32> to vector<16x32xf32>
    %244 = arith.mulf %242, %243 : vector<16x32xf32>
    %245 = vector.broadcast %226 : vector<1x32xf32> to vector<16x32xf32>
    %246 = arith.addf %244, %245 : vector<16x32xf32>
    %247 = arith.truncf %246 : vector<16x32xf32> to vector<16x32xbf16>
    %c1_129 = arith.constant 1 : index
    %c0_130 = arith.constant 0 : index
    %c0_131 = arith.constant 0 : index
    %248 = vector.load %arg15[%c1_129, %c0_130, %c0_131] : memref<2x32x64xbf16, #tpu.memory_space<vmem>>, vector<1x32x64xbf16>
    %249 = vector.shape_cast %248 : vector<1x32x64xbf16> to vector<32x64xbf16>
    %cst_132 = arith.constant dense<0.000000e+00> : vector<16x64xf32>
    %250 = tpu.matmul %247, %249, %cst_132 {dimension_numbers = #tpu.dot_dimension_numbers<[1], [0], [0], [1], [0, 0, 1, 1], [], []>} : vector<16x32xbf16>, vector<32x64xbf16>, vector<16x64xf32> -> vector<16x64xf32>
    %c1_133 = arith.constant 1 : index
    %c0_134 = arith.constant 0 : index
    %c0_135 = arith.constant 0 : index
    %251 = vector.load %arg16[%c1_133, %c0_134, %c0_135] : memref<2x1x64xf32, #tpu.memory_space<vmem>>, vector<1x1x64xf32>
    %252 = vector.shape_cast %251 : vector<1x1x64xf32> to vector<1x64xf32>
    %253 = vector.broadcast %252 : vector<1x64xf32> to vector<16x64xf32>
    %254 = arith.addf %250, %253 : vector<16x64xf32>
    %255 = arith.mulf %254, %254 : vector<16x64xf32>
    %256 = arith.mulf %254, %255 : vector<16x64xf32>
    %cst_136 = arith.constant 4.471500e-02 : f32
    %257 = vector.broadcast %cst_136 : f32 to vector<16x64xf32>
    %258 = arith.mulf %257, %256 : vector<16x64xf32>
    %259 = arith.addf %254, %258 : vector<16x64xf32>
    %cst_137 = arith.constant 0.797884583 : f32
    %260 = vector.broadcast %cst_137 : f32 to vector<16x64xf32>
    %261 = arith.mulf %260, %259 : vector<16x64xf32>
    %262 = math.tanh %261 : vector<16x64xf32>
    %cst_138 = arith.constant 1.000000e+00 : f32
    %263 = vector.broadcast %cst_138 : f32 to vector<16x64xf32>
    %264 = arith.addf %263, %262 : vector<16x64xf32>
    %cst_139 = arith.constant 5.000000e-01 : f32
    %265 = vector.broadcast %cst_139 : f32 to vector<16x64xf32>
    %266 = arith.mulf %265, %264 : vector<16x64xf32>
    %267 = arith.mulf %254, %266 : vector<16x64xf32>
    %268 = arith.truncf %267 : vector<16x64xf32> to vector<16x64xbf16>
    %c1_140 = arith.constant 1 : index
    %c0_141 = arith.constant 0 : index
    %c0_142 = arith.constant 0 : index
    %269 = vector.load %arg17[%c1_140, %c0_141, %c0_142] : memref<2x64x32xbf16, #tpu.memory_space<vmem>>, vector<1x64x32xbf16>
    %270 = vector.shape_cast %269 : vector<1x64x32xbf16> to vector<64x32xbf16>
    %cst_143 = arith.constant dense<0.000000e+00> : vector<16x32xf32>
    %271 = tpu.matmul %268, %270, %cst_143 {dimension_numbers = #tpu.dot_dimension_numbers<[1], [0], [0], [1], [0, 0, 1, 1], [], []>} : vector<16x64xbf16>, vector<64x32xbf16>, vector<16x32xf32> -> vector<16x32xf32>
    %c1_144 = arith.constant 1 : index
    %c0_145 = arith.constant 0 : index
    %c0_146 = arith.constant 0 : index
    %272 = vector.load %arg18[%c1_144, %c0_145, %c0_146] : memref<2x1x32xf32, #tpu.memory_space<vmem>>, vector<1x1x32xf32>
    %273 = vector.shape_cast %272 : vector<1x1x32xf32> to vector<1x32xf32>
    %274 = vector.broadcast %273 : vector<1x32xf32> to vector<16x32xf32>
    %275 = arith.addf %271, %274 : vector<16x32xf32>
    %276 = arith.addf %275, %246 : vector<16x32xf32>
    %c1_147 = arith.constant 1 : index
    %c0_148 = arith.constant 0 : index
    %c0_149 = arith.constant 0 : index
    %277 = vector.load %arg19[%c1_147, %c0_148, %c0_149] : memref<2x1x32xf32, #tpu.memory_space<vmem>>, vector<1x1x32xf32>
    %278 = vector.shape_cast %277 : vector<1x1x32xf32> to vector<1x32xf32>
    %c1_150 = arith.constant 1 : index
    %c0_151 = arith.constant 0 : index
    %c0_152 = arith.constant 0 : index
    %279 = vector.load %arg20[%c1_150, %c0_151, %c0_152] : memref<2x1x32xf32, #tpu.memory_space<vmem>>, vector<1x1x32xf32>
    %280 = vector.shape_cast %279 : vector<1x1x32xf32> to vector<1x32xf32>
    %cst_153 = arith.constant dense<0.000000e+00> : vector<16xf32>
    %281 = vector.multi_reduction <add>, %276, %cst_153 [1] : vector<16x32xf32> to vector<16xf32>
    %282 = vector.shape_cast %281 : vector<16xf32> to vector<16x1xf32>
    %cst_154 = arith.constant 3.200000e+01 : f32
    %283 = vector.broadcast %cst_154 : f32 to vector<16x1xf32>
    %284 = arith.divf %282, %283 : vector<16x1xf32>
    %285 = vector.broadcast %284 : vector<16x1xf32> to vector<16x32xf32>
    %286 = arith.subf %276, %285 : vector<16x32xf32>
    %287 = arith.mulf %286, %286 : vector<16x32xf32>
    %cst_155 = arith.constant dense<0.000000e+00> : vector<16xf32>
    %288 = vector.multi_reduction <add>, %287, %cst_155 [1] : vector<16x32xf32> to vector<16xf32>
    %289 = vector.shape_cast %288 : vector<16xf32> to vector<16x1xf32>
    %cst_156 = arith.constant 3.200000e+01 : f32
    %290 = vector.broadcast %cst_156 : f32 to vector<16x1xf32>
    %291 = arith.divf %289, %290 : vector<16x1xf32>
    %cst_157 = arith.constant 9.99999974E-6 : f32
    %292 = vector.broadcast %cst_157 : f32 to vector<16x1xf32>
    %293 = arith.addf %291, %292 : vector<16x1xf32>
    %294 = math.rsqrt %293 : vector<16x1xf32>
    %295 = vector.broadcast %294 : vector<16x1xf32> to vector<16x32xf32>
    %296 = arith.mulf %286, %295 : vector<16x32xf32>
    %297 = vector.broadcast %278 : vector<1x32xf32> to vector<16x32xf32>
    %298 = arith.mulf %296, %297 : vector<16x32xf32>
    %299 = vector.broadcast %280 : vector<1x32xf32> to vector<16x32xf32>
    %300 = arith.addf %298, %299 : vector<16x32xf32>
    %c0_158 = arith.constant 0 : index
    %c0_159 = arith.constant 0 : index
    %301 = vector.load %arg21[%c0_158, %c0_159] : memref<16x32xf32, #tpu.memory_space<vmem>>, vector<16x32xf32>
    tpu.vector_store %arg21[%c0_158, %c0_159], %300 {strides = array<i32>} : memref<16x32xf32, #tpu.memory_space<vmem>>, vector<16x32xf32>,
    return
  }
}

</mosaic_0001>

<llo_original>
// kernel: bert_forward.1
$region0: #{bert_forward.1}
  #allocation0 [shape = 'u32[]', space=smem, size = 0x4, offset = 0x4, fixed_abs, tag = 'smem constant byte address 0x4 - core index']
  #allocation1 [shape = 'u32[144,128]{1,0:T(1,128)}', space=vmem, size = 0x12000, scoped, tag = 'internal scratch']
  %s0 = inlined_call_operand.vmem [shape: f32[16,32], index: 0, kind: input, shape index: {}]
  %s1 = inlined_call_operand.vmem [shape: f32[64,16], index: 1, kind: input, shape index: {}]
  %s2 = inlined_call_operand.vmem [shape: f32[64,32], index: 2, kind: input, shape index: {}]
  %s3 = inlined_call_operand.vmem [shape: f32[1,32], index: 3, kind: input, shape index: {}]
  %s4 = inlined_call_operand.vmem [shape: f32[1,32], index: 4, kind: input, shape index: {}]
  %s5 = inlined_call_operand.vmem [shape: bf16[2,32,32], index: 5, kind: input, shape index: {}]
  %s6 = inlined_call_operand.vmem [shape: f32[2,1,32], index: 6, kind: input, shape index: {}]
  %s7 = inlined_call_operand.vmem [shape: bf16[2,32,32], index: 7, kind: input, shape index: {}]
  %s8 = inlined_call_operand.vmem [shape: f32[2,1,32], index: 8, kind: input, shape index: {}]
  %s9 = inlined_call_operand.vmem [shape: bf16[2,32,32], index: 9, kind: input, shape index: {}]
  %s10 = inlined_call_operand.vmem [shape: f32[2,1,32], index: 10, kind: input, shape index: {}]
  %s11 = inlined_call_operand.vmem [shape: bf16[2,32,32], index: 11, kind: input, shape index: {}]
  %s12 = inlined_call_operand.vmem [shape: f32[2,1,32], index: 12, kind: input, shape index: {}]
  %s13 = inlined_call_operand.vmem [shape: f32[2,1,32], index: 13, kind: input, shape index: {}]
  %s14 = inlined_call_operand.vmem [shape: f32[2,1,32], index: 14, kind: input, shape index: {}]
  %s15 = inlined_call_operand.vmem [shape: bf16[2,32,64], index: 15, kind: input, shape index: {}]
  %s16 = inlined_call_operand.vmem [shape: f32[2,1,64], index: 16, kind: input, shape index: {}]
  %s17 = inlined_call_operand.vmem [shape: bf16[2,64,32], index: 17, kind: input, shape index: {}]
  %s18 = inlined_call_operand.vmem [shape: f32[2,1,32], index: 18, kind: input, shape index: {}]
  %s19 = inlined_call_operand.vmem [shape: f32[2,1,32], index: 19, kind: input, shape index: {}]
  %s20 = inlined_call_operand.vmem [shape: f32[2,1,32], index: 20, kind: input, shape index: {}]
  %s21 = inlined_call_operand.hbm [shape: f32[16,32], index: 21, kind: output, shape index: {}]
  %s22 = sld [smem:[#allocation0]]
  $region94: #{bert_forward.1} parent=0
    _
  %s24 = ssub.s32 1, %s22
  %s25 = scalar_select 0, %s24, %s22
  $region1: #{bert_forward.1} parent=0
    #allocation2 [shape = 'u8[8192]{0}', space=vmem, size = 0x2000, scoped, tag = 'output window, operand 0, single buffered']
    #allocation3 [shape = 's32[1]{0}', space=sflag, size = 0x4, scoped, tag = 'scoped memory for bert_forward.1']
    %26 = vsyncpa [#allocation3], 0
    // Predicated region
    $region2: #{bert_forward.1} parent=1 // pred_check
      _
    $region3: #{bert_forward.1} parent=1 // pred_check_branch
      %28 = sbr.rel (0) target = $region5
    $region4: #{bert_forward.1} parent=1 // pred_region
      _
    $region5: #{bert_forward.1} parent=1 // pred_fallthru
      _
    // Predicated region
    $region6: #{bert_forward.1} parent=1 // pred_check
      _
    $region7: #{bert_forward.1} parent=1 // pred_check_branch
      %30 = sbr.rel (0) target = $region9
    $region8: #{bert_forward.1} parent=1 // pred_region
      _
    $region9: #{bert_forward.1} parent=1 // pred_fallthru
      _
    // Predicated region
    $region10: #{bert_forward.1} parent=1 // pred_check
      _
    $region11: #{bert_forward.1} parent=1 // pred_check_branch
      %32 = sbr.rel (0) target = $region13
    $region12: #{bert_forward.1} parent=1 // pred_region
      _
    $region13: #{bert_forward.1} parent=1 // pred_fallthru
      _
    // Predicated region
    $region14: #{bert_forward.1} parent=1 // pred_check
      _
    $region15: #{bert_forward.1} parent=1 // pred_check_branch
      %34 = sbr.rel (0) target = $region17
    $region16: #{bert_forward.1} parent=1 // pred_region
      _
    $region17: #{bert_forward.1} parent=1 // pred_fallthru
      _
    // Predicated region
    $region18: #{bert_forward.1} parent=1 // pred_check
      _
    $region19: #{bert_forward.1} parent=1 // pred_check_branch
      %36 = sbr.rel (0) target = $region21
    $region20: #{bert_forward.1} parent=1 // pred_region
      _
    $region21: #{bert_forward.1} parent=1 // pred_fallthru
      _
    // Predicated region
    $region22: #{bert_forward.1} parent=1 // pred_check
      _
    $region23: #{bert_forward.1} parent=1 // pred_check_branch
      %38 = sbr.rel (0) target = $region25
    $region24: #{bert_forward.1} parent=1 // pred_region
      _
    $region25: #{bert_forward.1} parent=1 // pred_fallthru
      _
    // Predicated region
    $region26: #{bert_forward.1} parent=1 // pred_check
      _
    $region27: #{bert_forward.1} parent=1 // pred_check_branch
      %40 = sbr.rel (0) target = $region29
    $region28: #{bert_forward.1} parent=1 // pred_region
      _
    $region29: #{bert_forward.1} parent=1 // pred_fallthru
      _
    // Predicated region
    $region30: #{bert_forward.1} parent=1 // pred_check
      _
    $region31: #{bert_forward.1} parent=1 // pred_check_branch
      %42 = sbr.rel (0) target = $region33
    $region32: #{bert_forward.1} parent=1 // pred_region
      _
    $region33: #{bert_forward.1} parent=1 // pred_fallthru
      _
    // Predicated region
    $region34: #{bert_forward.1} parent=1 // pred_check
      _
    $region35: #{bert_forward.1} parent=1 // pred_check_branch
      %44 = sbr.rel (0) target = $region37
    $region36: #{bert_forward.1} parent=1 // pred_region
      _
    $region37: #{bert_forward.1} parent=1 // pred_fallthru
      _
    // Predicated region
    $region38: #{bert_forward.1} parent=1 // pred_check
      _
    $region39: #{bert_forward.1} parent=1 // pred_check_branch
      %46 = sbr.rel (0) target = $region41
    $region40: #{bert_forward.1} parent=1 // pred_region
      _
    $region41: #{bert_forward.1} parent=1 // pred_fallthru
      _
    // Predicated region
    $region42: #{bert_forward.1} parent=1 // pred_check
      _
    $region43: #{bert_forward.1} parent=1 // pred_check_branch
      %48 = sbr.rel (0) target = $region45
    $region44: #{bert_forward.1} parent=1 // pred_region
      _
    $region45: #{bert_forward.1} parent=1 // pred_fallthru
      _
    // Predicated region
    $region46: #{bert_forward.1} parent=1 // pred_check
      _
    $region47: #{bert_forward.1} parent=1 // pred_check_branch
      %50 = sbr.rel (0) target = $region49
    $region48: #{bert_forward.1} parent=1 // pred_region
      _
    $region49: #{bert_forward.1} parent=1 // pred_fallthru
      _
    // Predicated region
    $region50: #{bert_forward.1} parent=1 // pred_check
      _
    $region51: #{bert_forward.1} parent=1 // pred_check_branch
      %52 = sbr.rel (0) target = $region53
    $region52: #{bert_forward.1} parent=1 // pred_region
      _
    $region53: #{bert_forward.1} parent=1 // pred_fallthru
      _
    // Predicated region
    $region54: #{bert_forward.1} parent=1 // pred_check
      _
    $region55: #{bert_forward.1} parent=1 // pred_check_branch
      %54 = sbr.rel (0) target = $region57
    $region56: #{bert_forward.1} parent=1 // pred_region
      _
    $region57: #{bert_forward.1} parent=1 // pred_fallthru
      _
    // Predicated region
    $region58: #{bert_forward.1} parent=1 // pred_check
      _
    $region59: #{bert_forward.1} parent=1 // pred_check_branch
      %56 = sbr.rel (0) target = $region61
    $region60: #{bert_forward.1} parent=1 // pred_region
      _
    $region61: #{bert_forward.1} parent=1 // pred_fallthru
      _
    // Predicated region
    $region62: #{bert_forward.1} parent=1 // pred_check
      _
    $region63: #{bert_forward.1} parent=1 // pred_check_branch
      %58 = sbr.rel (0) target = $region65
    $region64: #{bert_forward.1} parent=1 // pred_region
      _
    $region65: #{bert_forward.1} parent=1 // pred_fallthru
      _
    // Predicated region
    $region66: #{bert_forward.1} parent=1 // pred_check
      _
    $region67: #{bert_forward.1} parent=1 // pred_check_branch
      %60 = sbr.rel (0) target = $region69
    $region68: #{bert_forward.1} parent=1 // pred_region
      _
    $region69: #{bert_forward.1} parent=1 // pred_fallthru
      _
    // Predicated region
    $region70: #{bert_forward.1} parent=1 // pred_check
      _
    $region71: #{bert_forward.1} parent=1 // pred_check_branch
      %62 = sbr.rel (0) target = $region73
    $region72: #{bert_forward.1} parent=1 // pred_region
      _
    $region73: #{bert_forward.1} parent=1 // pred_fallthru
      _
    // Predicated region
    $region74: #{bert_forward.1} parent=1 // pred_check
      _
    $region75: #{bert_forward.1} parent=1 // pred_check_branch
      %64 = sbr.rel (0) target = $region77
    $region76: #{bert_forward.1} parent=1 // pred_region
      _
    $region77: #{bert_forward.1} parent=1 // pred_fallthru
      _
    // Predicated region
    $region78: #{bert_forward.1} parent=1 // pred_check
      _
    $region79: #{bert_forward.1} parent=1 // pred_check_branch
      %66 = sbr.rel (0) target = $region81
    $region80: #{bert_forward.1} parent=1 // pred_region
      _
    $region81: #{bert_forward.1} parent=1 // pred_fallthru
      _
    // Predicated region
    $region82: #{bert_forward.1} parent=1 // pred_check
      _
    $region83: #{bert_forward.1} parent=1 // pred_check_branch
      %68 = sbr.rel (0) target = $region85
    $region84: #{bert_forward.1} parent=1 // pred_region
      _
    $region85: #{bert_forward.1} parent=1 // pred_fallthru
      _
    %v70 = vld [vmem:[%s2] sm:$0xff]
    %v71 = vld [vmem:[%s2 + $0x8] sm:$0xff]
    %v72 = vld [vmem:[%s2 + $0x10] sm:$0xff]
    %v73 = vld [vmem:[%s2 + $0x18] sm:$0xff]
    %v74 = vld [vmem:[%s2 + $0x20] sm:$0xff]
    %v75 = vld [vmem:[%s2 + $0x28] sm:$0xff]
    %v76 = vld [vmem:[%s2 + $0x30] sm:$0xff]
    %v77 = vld [vmem:[%s2 + $0x38] sm:$0xff]
    %v78 = vld [vmem:[%s1] sm:$0xff]
    %v79 = vld [vmem:[%s1 + $0x8] sm:$0xff]
    %v80 = vld [vmem:[%s1 + $0x10] sm:$0xff]
    %v81 = vld [vmem:[%s1 + $0x18] sm:$0xff]
    %v82 = vld [vmem:[%s1 + $0x20] sm:$0xff]
    %v83 = vld [vmem:[%s1 + $0x28] sm:$0xff]
    %v84 = vld [vmem:[%s1 + $0x30] sm:$0xff]
    %v85 = vld [vmem:[%s1 + $0x38] sm:$0xff]
    %v86 = vld [vmem:[%s0] sm:$0xff]
    %v87 = vld [vmem:[%s0 + $0x8] sm:$0xff]
    %v88 = vld [vmem:[%s3] sm:$0x1]
    %v89 = vld [vmem:[%s4] sm:$0x1]
    %vm90 = vcmask 261120
    %v91 = vsel %vm90, %v86, 0.0
    %92 = vadd.xlane.f32.xlu0 %v91
    %v93 = vpop.xlane.xlu0 %92
    %v94 = vsel %vm90, %v87, 0.0
    %95 = vadd.xlane.f32.xlu0 %v94
    %v96 = vpop.xlane.xlu0 %95
    %v97 = vrcp.pop 32.0
    %v98 = vmul.f32 %v93, %v97
    %v99 = vmul.f32 %v96, %v97
    %v100 = vsub.f32 %v86, %v98
    %v101 = vsub.f32 %v87, %v99
    %v102 = vmul.f32 %v100, %v100
    %v103 = vmul.f32 %v101, %v101
    %v104 = vsel %vm90, %v102, 0.0
    %105 = vadd.xlane.f32.xlu0 %v104
    %v106 = vpop.xlane.xlu0 %105
    %v107 = vsel %vm90, %v103, 0.0
    %108 = vadd.xlane.f32.xlu0 %v107
    %v109 = vpop.xlane.xlu0 %108
    %v110 = vmul.f32 %v106, %v97
    %v111 = vmul.f32 %v109, %v97
    %v112 = vadd.f32 %v110, 1e-05
    %v113 = vadd.f32 %v111, 1e-05
    %v114 = vrsqrt.pop %v112
    %v115 = vrsqrt.pop %v113
    %v116 = vmul.f32 %v100, %v114
    %v117 = vmul.f32 %v101, %v115
    %v119 = vlaneseq
    %v120 = vshrl.u32 %v119, 7
    %v121 = vsub.s32 0, %v120
    %v122 = vrot.slane %v88, %v121
    %v124 = vmul.f32 %v116, %v122
    %v125 = vmul.f32 %v117, %v122
    %v127 = vlaneseq
    %v128 = vshrl.u32 %v127, 7
    %v129 = vsub.s32 0, %v128
    %v130 = vrot.slane %v89, %v129
    %v132 = vadd.f32 %v124, %v130
    %v133 = vadd.f32 %v125, %v130
    %v134 = vpack.c.bf16 %v133, %v132
    %v135 = vld [vmem:[%s5] sm:$0xf]
    %v136 = vld [vmem:[%s5 + $0x4] sm:$0xf]
    %v137 = vld [vmem:[%s5 + $0x8] sm:$0xf]
    %v138 = vld [vmem:[%s5 + $0xc] sm:$0xf]
    %v139 = vld [vmem:[%s6] sm:$0x1]
    %v141 = vlaneseq
    %v142 = vshrl.u32 %v141, 7
    %v143 = vsub.s32 0, %v142
    %v144 = vrot.slane %v139, %v143
    %v150 = vunpack.c.l.b16 %v135
    %v151 = vunpack.c.l.b16 %v136
    %v152 = vunpack.c.l.b16 %v137
    %v153 = vunpack.c.l.b16 %v138
    %v154 = vpack.c.b16 %v151, %v150
    %v155 = vpack.c.b16 %v153, %v152
    %v159 = vsel %vm90, %v134, 0
    %161 = vmatprep.subr.bf16.mxu0 0
    %162 = vmatpush1.bf16.msra.mxu0 0
    %163 = vmatprep.subr.bf16.mxu0 0
    %164 = vmatpush1.bf16.msra.mxu0 0
    %165 = vmatprep.subr.bf16.mxu0 0
    %166 = vmatpush1.bf16.msra.mxu0 0
    %167 = vmatprep.subr.bf16.mxu0 0
    %168 = vmatpush1.bf16.msra.mxu0 0
    %169 = vmatprep.subr.bf16.mxu0 0
    %170 = vmatpush1.bf16.msra.mxu0 0
    %171 = vmatprep.subr.bf16.mxu0 0
    %172 = vmatpush1.bf16.msra.mxu0 0
    %173 = vmatprep.subr.bf16.mxu0 0
    %174 = vmatpush1.bf16.msra.mxu0 %v155
    %175 = vmatprep.subr.bf16.mxu0 0
    %176 = vmatpush1.bf16.msra.mxu0 %v154
    %177 = vmatprep.subr.bf16.mxu0 0
    %178 = vmatpush2.bf16.msra.mxu0 0
    %179 = vmatprep.subr.bf16.mxu0 0
    %180 = vmatpush2.bf16.msra.mxu0 0
    %181 = vmatprep.subr.bf16.mxu0 0
    %182 = vmatpush2.bf16.msra.mxu0 0
    %183 = vmatprep.subr.bf16.mxu0 0
    %184 = vmatpush2.bf16.msra.mxu0 0
    %185 = vmatprep.subr.bf16.mxu0 0
    %186 = vmatpush2.bf16.msra.mxu0 0
    %187 = vmatprep.subr.bf16.mxu0 0
    %188 = vmatpush2.bf16.msra.mxu0 0
    %189 = vmatprep.subr.bf16.mxu0 0
    %190 = vmatpush2.bf16.msra.mxu0 0
    %191 = vmatprep.subr.bf16.mxu0 0
    %192 = vmatpush2.bf16.msra.mxu0 0
    %193 = vmatprep.mubr.bf16.mxu0 0
    %194 = vmatmul.mubr.bf16.gmra.mxu0 %v159
    %v195 = vpop.f32.mrf.mxu0
    %v196 = vadd.f32 %v144, %v195
    %v197 = vpop.f32.mrf.mxu0
    %v198 = vpop.f32.mrf.mxu0
    %v199 = vadd.f32 %v144, %v198
    %v200 = vpop.f32.mrf.mxu0
    %201 = vdwg.mxu0
    %v202 = vmul.f32 %v196, 0.35355338
    %v203 = vmul.f32 %v199, 0.35355338
    %v204 = vld [vmem:[%s7] sm:$0xf]
    %v205 = vld [vmem:[%s7 + $0x4] sm:$0xf]
    %v206 = vld [vmem:[%s7 + $0x8] sm:$0xf]
    %v207 = vld [vmem:[%s7 + $0xc] sm:$0xf]
    %v208 = vld [vmem:[%s8] sm:$0x1]
    %v210 = vlaneseq
    %v211 = vshrl.u32 %v210, 7
    %v212 = vsub.s32 0, %v211
    %v213 = vrot.slane %v208, %v212
    %v219 = vunpack.c.l.b16 %v204
    %v220 = vunpack.c.l.b16 %v205
    %v221 = vunpack.c.l.b16 %v206
    %v222 = vunpack.c.l.b16 %v207
    %v223 = vpack.c.b16 %v220, %v219
    %v224 = vpack.c.b16 %v222, %v221
    %227 = vmatprep.subr.bf16.mxu0 0
    %228 = vmatpush1.bf16.msra.mxu0 0
    %229 = vmatprep.subr.bf16.mxu0 0
    %230 = vmatpush1.bf16.msra.mxu0 0
    %231 = vmatprep.subr.bf16.mxu0 0
    %232 = vmatpush1.bf16.msra.mxu0 0
    %233 = vmatprep.subr.bf16.mxu0 0
    %234 = vmatpush1.bf16.msra.mxu0 0
    %235 = vmatprep.subr.bf16.mxu0 0
    %236 = vmatpush1.bf16.msra.mxu0 0
    %237 = vmatprep.subr.bf16.mxu0 0
    %238 = vmatpush1.bf16.msra.mxu0 0
    %239 = vmatprep.subr.bf16.mxu0 0
    %240 = vmatpush1.bf16.msra.mxu0 %v224
    %241 = vmatprep.subr.bf16.mxu0 0
    %242 = vmatpush1.bf16.msra.mxu0 %v223
    %243 = vmatprep.subr.bf16.mxu0 0
    %244 = vmatpush2.bf16.msra.mxu0 0
    %245 = vmatprep.subr.bf16.mxu0 0
    %246 = vmatpush2.bf16.msra.mxu0 0
    %247 = vmatprep.subr.bf16.mxu0 0
    %248 = vmatpush2.bf16.msra.mxu0 0
    %249 = vmatprep.subr.bf16.mxu0 0
    %250 = vmatpush2.bf16.msra.mxu0 0
    %251 = vmatprep.subr.bf16.mxu0 0
    %252 = vmatpush2.bf16.msra.mxu0 0
    %253 = vmatprep.subr.bf16.mxu0 0
    %254 = vmatpush2.bf16.msra.mxu0 0
    %255 = vmatprep.subr.bf16.mxu0 0
    %256 = vmatpush2.bf16.msra.mxu0 0
    %257 = vmatprep.subr.bf16.mxu0 0
    %258 = vmatpush2.bf16.msra.mxu0 0
    %259 = vmatprep.mubr.bf16.mxu0 0
    %260 = vmatmul.mubr.bf16.gmra.mxu0 %v159
    %v261 = vpop.f32.mrf.mxu0
    %v262 = vadd.f32 %v213, %v261
    %v263 = vpop.f32.mrf.mxu0
    %v264 = vpop.f32.mrf.mxu0
    %v265 = vadd.f32 %v213, %v264
    %v266 = vpop.f32.mrf.mxu0
    %267 = vdwg.mxu0
    %v268 = vld [vmem:[%s9] sm:$0xf]
    %v269 = vld [vmem:[%s9 + $0x4] sm:$0xf]
    %v270 = vld [vmem:[%s9 + $0x8] sm:$0xf]
    %v271 = vld [vmem:[%s9 + $0xc] sm:$0xf]
    %v272 = vld [vmem:[%s10] sm:$0x1]
    %v274 = vlaneseq
    %v275 = vshrl.u32 %v274, 7
    %v276 = vsub.s32 0, %v275
    %v277 = vrot.slane %v272, %v276
    %v283 = vunpack.c.l.b16 %v268
    %v284 = vunpack.c.l.b16 %v269
    %v285 = vunpack.c.l.b16 %v270
    %v286 = vunpack.c.l.b16 %v271
    %v287 = vpack.c.b16 %v284, %v283
    %v288 = vpack.c.b16 %v286, %v285
    %291 = vmatprep.subr.bf16.mxu0 0
    %292 = vmatpush1.bf16.msra.mxu0 0
    %293 = vmatprep.subr.bf16.mxu0 0
    %294 = vmatpush1.bf16.msra.mxu0 0
    %295 = vmatprep.subr.bf16.mxu0 0
    %296 = vmatpush1.bf16.msra.mxu0 0
    %297 = vmatprep.subr.bf16.mxu0 0
    %298 = vmatpush1.bf16.msra.mxu0 0
    %299 = vmatprep.subr.bf16.mxu0 0
    %300 = vmatpush1.bf16.msra.mxu0 0
    %301 = vmatprep.subr.bf16.mxu0 0
    %302 = vmatpush1.bf16.msra.mxu0 0
    %303 = vmatprep.subr.bf16.mxu0 0
    %304 = vmatpush1.bf16.msra.mxu0 %v288
    %305 = vmatprep.subr.bf16.mxu0 0
    %306 = vmatpush1.bf16.msra.mxu0 %v287
    %307 = vmatprep.subr.bf16.mxu0 0
    %308 = vmatpush2.bf16.msra.mxu0 0
    %309 = vmatprep.subr.bf16.mxu0 0
    %310 = vmatpush2.bf16.msra.mxu0 0
    %311 = vmatprep.subr.bf16.mxu0 0
    %312 = vmatpush2.bf16.msra.mxu0 0
    %313 = vmatprep.subr.bf16.mxu0 0
    %314 = vmatpush2.bf16.msra.mxu0 0
    %315 = vmatprep.subr.bf16.mxu0 0
    %316 = vmatpush2.bf16.msra.mxu0 0
    %317 = vmatprep.subr.bf16.mxu0 0
    %318 = vmatpush2.bf16.msra.mxu0 0
    %319 = vmatprep.subr.bf16.mxu0 0
    %320 = vmatpush2.bf16.msra.mxu0 0
    %321 = vmatprep.subr.bf16.mxu0 0
    %322 = vmatpush2.bf16.msra.mxu0 0
    %323 = vmatprep.mubr.bf16.mxu0 0
    %324 = vmatmul.mubr.bf16.gmra.mxu0 %v159
    %v325 = vpop.f32.mrf.mxu0
    %v326 = vadd.f32 %v277, %v325
    %v327 = vpop.f32.mrf.mxu0
    %v328 = vpop.f32.mrf.mxu0
    %v329 = vadd.f32 %v277, %v328
    %v330 = vpop.f32.mrf.mxu0
    %331 = vdwg.mxu0
    %v332 = vmul.f32 %v202, %v70
    %v333 = vmul.f32 %v203, %v71
    %v334 = vmul.f32 %v202, %v72
    %v335 = vmul.f32 %v203, %v73
    %v336 = vmul.f32 %v202, %v74
    %v337 = vmul.f32 %v203, %v75
    %v338 = vmul.f32 %v202, %v76
    %v339 = vmul.f32 %v203, %v77
    %v340 = vpack.c.bf16 %v333, %v332
    %v341 = vpack.c.bf16 %v335, %v334
    %v342 = vpack.c.bf16 %v337, %v336
    %v343 = vpack.c.bf16 %v339, %v338
    %v344 = vpack.c.bf16 %v265, %v262
    %v346 = vsel %vm90, %v340, 0
    %v349 = vsel %vm90, %v341, 0
    %v352 = vsel %vm90, %v342, 0
    %v355 = vsel %vm90, %v343, 0
    %v358 = vsel %vm90, %v344, 0
    %360 = vmatprep.subr.bf16.mxu0 0
    %361 = vmatpush1.bf16.xpose.msra.mxu0 0
    %362 = vmatprep.subr.bf16.mxu0 0
    %363 = vmatpush1.bf16.xpose.msra.mxu0 0
    %364 = vmatprep.subr.bf16.mxu0 0
    %365 = vmatpush1.bf16.xpose.msra.mxu0 0
    %366 = vmatprep.subr.bf16.mxu0 0
    %367 = vmatpush1.bf16.xpose.msra.mxu0 0
    %368 = vmatprep.subr.bf16.mxu0 0
    %369 = vmatpush1.bf16.xpose.msra.mxu0 0
    %370 = vmatprep.subr.bf16.mxu0 0
    %371 = vmatpush1.bf16.xpose.msra.mxu0 0
    %372 = vmatprep.subr.bf16.mxu0 0
    %373 = vmatpush1.bf16.xpose.msra.mxu0 0
    %374 = vmatprep.subr.bf16.mxu0 0
    %375 = vmatpush1.bf16.xpose.msra.mxu0 %v358
    %376 = vmatprep.subr.bf16.mxu0 0
    %377 = vmatpush2.bf16.xpose.msra.mxu0 0
    %378 = vmatprep.subr.bf16.mxu0 0
    %379 = vmatpush2.bf16.xpose.msra.mxu0 0
    %380 = vmatprep.subr.bf16.mxu0 0
    %381 = vmatpush2.bf16.xpose.msra.mxu0 0
    %382 = vmatprep.subr.bf16.mxu0 0
    %383 = vmatpush2.bf16.xpose.msra.mxu0 0
    %384 = vmatprep.subr.bf16.mxu0 0
    %385 = vmatpush2.bf16.xpose.msra.mxu0 0
    %386 = vmatprep.subr.bf16.mxu0 0
    %387 = vmatpush2.bf16.xpose.msra.mxu0 0
    %388 = vmatprep.subr.bf16.mxu0 0
    %389 = vmatpush2.bf16.xpose.msra.mxu0 0
    %390 = vmatprep.subr.bf16.mxu0 0
    %391 = vmatpush2.bf16.xpose.msra.mxu0 0
    %392 = vmatprep.mubr.bf16.mxu0 0
    %393 = vmatmul.mubr.bf16.gmra.mxu0 %v346
    %v394 = vpop.f32.mrf.mxu0
    %v395 = vadd.f32 %v78, %v394
    %v396 = vpop.f32.mrf.mxu0
    %v397 = vpop.f32.mrf.mxu0
    %v398 = vadd.f32 %v79, %v397
    %v399 = vpop.f32.mrf.mxu0
    %400 = vmatprep.mubr.bf16.mxu0 0
    %401 = vmatmul.mubr.bf16.gmra.mxu0 %v349
    %v402 = vpop.f32.mrf.mxu0
    %v403 = vadd.f32 %v80, %v402
    %v404 = vpop.f32.mrf.mxu0
    %v405 = vpop.f32.mrf.mxu0
    %v406 = vadd.f32 %v81, %v405
    %v407 = vpop.f32.mrf.mxu0
    %408 = vmatprep.mubr.bf16.mxu0 0
    %409 = vmatmul.mubr.bf16.gmra.mxu0 %v352
    %v410 = vpop.f32.mrf.mxu0
    %v411 = vadd.f32 %v82, %v410
    %v412 = vpop.f32.mrf.mxu0
    %v413 = vpop.f32.mrf.mxu0
    %v414 = vadd.f32 %v83, %v413
    %v415 = vpop.f32.mrf.mxu0
    %416 = vmatprep.mubr.bf16.mxu0 0
    %417 = vmatmul.mubr.bf16.gmra.mxu0 %v355
    %v418 = vpop.f32.mrf.mxu0
    %v419 = vadd.f32 %v84, %v418
    %v420 = vpop.f32.mrf.mxu0
    %v421 = vpop.f32.mrf.mxu0
    %v422 = vadd.f32 %v85, %v421
    %v423 = vpop.f32.mrf.mxu0
    %424 = vdwg.mxu0
    %vm425 = vcmask 130048
    %v426 = vsel %vm425, %v395, -inf
    %427 = vmax.xlane.f32.xlu0 %v426
    %v428 = vpop.xlane.xlu0 %427
    %v429 = vsel %vm425, %v398, -inf
    %430 = vmax.xlane.f32.xlu0 %v429
    %v431 = vpop.xlane.xlu0 %430
    %v432 = vsel %vm425, %v403, -inf
    %433 = vmax.xlane.f32.xlu0 %v432
    %v434 = vpop.xlane.xlu0 %433
    %v435 = vsel %vm425, %v406, -inf
    %436 = vmax.xlane.f32.xlu0 %v435
    %v437 = vpop.xlane.xlu0 %436
    %v438 = vsel %vm425, %v411, -inf
    %439 = vmax.xlane.f32.xlu0 %v438
    %v440 = vpop.xlane.xlu0 %439
    %v441 = vsel %vm425, %v414, -inf
    %442 = vmax.xlane.f32.xlu0 %v441
    %v443 = vpop.xlane.xlu0 %442
    %v444 = vsel %vm425, %v419, -inf
    %445 = vmax.xlane.f32.xlu0 %v444
    %v446 = vpop.xlane.xlu0 %445
    %v447 = vsel %vm425, %v422, -inf
    %448 = vmax.xlane.f32.xlu0 %v447
    %v449 = vpop.xlane.xlu0 %448
    %v450 = vsub.f32 %v395, %v428
    %v451 = vsub.f32 %v398, %v431
    %v452 = vsub.f32 %v403, %v434
    %v453 = vsub.f32 %v406, %v437
    %v454 = vsub.f32 %v411, %v440
    %v455 = vsub.f32 %v414, %v443
    %v456 = vsub.f32 %v419, %v446
    %v457 = vsub.f32 %v422, %v449
    %v458 = vmul.f32 %v450, 1.442695
    %v459 = vpow.pop %v458
    %v460 = vmul.f32 %v451, 1.442695
    %v461 = vpow.pop %v460
    %v462 = vmul.f32 %v452, 1.442695
    %v463 = vpow.pop %v462
    %v464 = vmul.f32 %v453, 1.442695
    %v465 = vpow.pop %v464
    %v466 = vmul.f32 %v454, 1.442695
    %v467 = vpow.pop %v466
    %v468 = vmul.f32 %v455, 1.442695
    %v469 = vpow.pop %v468
    %v470 = vmul.f32 %v456, 1.442695
    %v471 = vpow.pop %v470
    %v472 = vmul.f32 %v457, 1.442695
    %v473 = vpow.pop %v472
    %v474 = vsel %vm425, %v459, 0.0
    %475 = vadd.xlane.f32.xlu0 %v474
    %v476 = vpop.xlane.xlu0 %475
    %v477 = vsel %vm425, %v461, 0.0
    %478 = vadd.xlane.f32.xlu0 %v477
    %v479 = vpop.xlane.xlu0 %478
    %v480 = vsel %vm425, %v463, 0.0
    %481 = vadd.xlane.f32.xlu0 %v480
    %v482 = vpop.xlane.xlu0 %481
    %v483 = vsel %vm425, %v465, 0.0
    %484 = vadd.xlane.f32.xlu0 %v483
    %v485 = vpop.xlane.xlu0 %484
    %v486 = vsel %vm425, %v467, 0.0
    %487 = vadd.xlane.f32.xlu0 %v486
    %v488 = vpop.xlane.xlu0 %487
    %v489 = vsel %vm425, %v469, 0.0
    %490 = vadd.xlane.f32.xlu0 %v489
    %v491 = vpop.xlane.xlu0 %490
    %v492 = vsel %vm425, %v471, 0.0
    %493 = vadd.xlane.f32.xlu0 %v492
    %v494 = vpop.xlane.xlu0 %493
    %v495 = vsel %vm425, %v473, 0.0
    %496 = vadd.xlane.f32.xlu0 %v495
    %v497 = vpop.xlane.xlu0 %496
    %v498 = vrcp.pop %v476
    %v499 = vrcp.pop %v479
    %v500 = vrcp.pop %v482
    %v501 = vrcp.pop %v485
    %v502 = vrcp.pop %v488
    %v503 = vrcp.pop %v491
    %v504 = vrcp.pop %v494
    %v505 = vrcp.pop %v497
    %v506 = vmul.f32 %v459, %v498
    %v507 = vmul.f32 %v461, %v499
    %v508 = vmul.f32 %v463, %v500
    %v509 = vmul.f32 %v465, %v501
    %v510 = vmul.f32 %v467, %v502
    %v511 = vmul.f32 %v469, %v503
    %v512 = vmul.f32 %v471, %v504
    %v513 = vmul.f32 %v473, %v505
    %v514 = vpack.c.bf16 %v507, %v506
    %v515 = vpack.c.bf16 %v509, %v508
    %v516 = vpack.c.bf16 %v511, %v510
    %v517 = vpack.c.bf16 %v513, %v512
    %v518 = vpack.c.bf16 %v329, %v326
    %v520 = vsel %vm425, %v514, 0
    %v523 = vsel %vm425, %v515, 0
    %v526 = vsel %vm425, %v516, 0
    %v529 = vsel %vm425, %v517, 0
    %531 = vmatprep.subr.bf16.mxu0 0
    %532 = vmatpush1.bf16.msra.mxu0 0
    %533 = vmatprep.subr.bf16.mxu0 0
    %534 = vmatpush1.bf16.msra.mxu0 0
    %535 = vmatprep.subr.bf16.mxu0 0
    %536 = vmatpush1.bf16.msra.mxu0 0
    %537 = vmatprep.subr.bf16.mxu0 0
    %538 = vmatpush1.bf16.msra.mxu0 0
    %539 = vmatprep.subr.bf16.mxu0 0
    %540 = vmatpush1.bf16.msra.mxu0 0
    %541 = vmatprep.subr.bf16.mxu0 0
    %542 = vmatpush1.bf16.msra.mxu0 0
    %543 = vmatprep.subr.bf16.mxu0 0
    %544 = vmatpush1.bf16.msra.mxu0 0
    %545 = vmatprep.subr.bf16.mxu0 0
    %546 = vmatpush1.bf16.msra.mxu0 %v518
    %547 = vmatprep.subr.bf16.mxu0 0
    %548 = vmatpush2.bf16.msra.mxu0 0
    %549 = vmatprep.subr.bf16.mxu0 0
    %550 = vmatpush2.bf16.msra.mxu0 0
    %551 = vmatprep.subr.bf16.mxu0 0
    %552 = vmatpush2.bf16.msra.mxu0 0
    %553 = vmatprep.subr.bf16.mxu0 0
    %554 = vmatpush2.bf16.msra.mxu0 0
    %555 = vmatprep.subr.bf16.mxu0 0
    %556 = vmatpush2.bf16.msra.mxu0 0
    %557 = vmatprep.subr.bf16.mxu0 0
    %558 = vmatpush2.bf16.msra.mxu0 0
    %559 = vmatprep.subr.bf16.mxu0 0
    %560 = vmatpush2.bf16.msra.mxu0 0
    %561 = vmatprep.subr.bf16.mxu0 0
    %562 = vmatpush2.bf16.msra.mxu0 0
    %563 = vmatprep.mubr.bf16.mxu0 0
    %564 = vmatmul.mubr.bf16.gmra.mxu0 %v520
    %v565 = vpop.f32.mrf.mxu0
    %v566 = vadd.f32 0.0, %v565
    %v567 = vpop.f32.mrf.mxu0
    %v568 = vpop.f32.mrf.mxu0
    %v569 = vadd.f32 0.0, %v568
    %v570 = vpop.f32.mrf.mxu0
    %571 = vmatprep.mubr.bf16.mxu0 0
    %572 = vmatmul.mubr.bf16.gmra.mxu0 %v523
    %v573 = vpop.f32.mrf.mxu0
    %v574 = vadd.f32 0.0, %v573
    %v575 = vpop.f32.mrf.mxu0
    %v576 = vpop.f32.mrf.mxu0
    %v577 = vadd.f32 0.0, %v576
    %v578 = vpop.f32.mrf.mxu0
    %579 = vmatprep.mubr.bf16.mxu0 0
    %580 = vmatmul.mubr.bf16.gmra.mxu0 %v526
    %v581 = vpop.f32.mrf.mxu0
    %v582 = vadd.f32 0.0, %v581
    %v583 = vpop.f32.mrf.mxu0
    %v584 = vpop.f32.mrf.mxu0
    %v585 = vadd.f32 0.0, %v584
    %v586 = vpop.f32.mrf.mxu0
    %587 = vmatprep.mubr.bf16.mxu0 0
    %588 = vmatmul.mubr.bf16.gmra.mxu0 %v529
    %v589 = vpop.f32.mrf.mxu0
    %v590 = vadd.f32 0.0, %v589
    %v591 = vpop.f32.mrf.mxu0
    %v592 = vpop.f32.mrf.mxu0
    %v593 = vadd.f32 0.0, %v592
    %v594 = vpop.f32.mrf.mxu0
    %595 = vdwg.mxu0
    %v596 = vmul.f32 %v566, %v70
    %v597 = vmul.f32 %v569, %v71
    %v598 = vmul.f32 %v574, %v72
    %v599 = vmul.f32 %v577, %v73
    %v600 = vmul.f32 %v582, %v74
    %v601 = vmul.f32 %v585, %v75
    %v602 = vmul.f32 %v590, %v76
    %v603 = vmul.f32 %v593, %v77
    %v604 = vpack.c.bf16 %v597, %v596
    %v605 = vpack.c.bf16 %v599, %v598
    %v606 = vpack.c.bf16 %v601, %v600
    %v607 = vpack.c.bf16 %v603, %v602
    %v608 = vld [vmem:[%s11] sm:$0xf]
    %v609 = vld [vmem:[%s11 + $0x4] sm:$0xf]
    %v610 = vld [vmem:[%s11 + $0x8] sm:$0xf]
    %v611 = vld [vmem:[%s11 + $0xc] sm:$0xf]
    %v616 = vunpack.c.l.b16 %v608
    %v617 = vunpack.c.l.b16 %v609
    %v618 = vunpack.c.l.b16 %v610
    %v619 = vunpack.c.l.b16 %v611
    %v620 = vpack.c.b16 %v617, %v616
    %v621 = vpack.c.b16 %v619, %v618
    %v625 = vsel %vm90, %v604, 0
    %v628 = vsel %vm90, %v605, 0
    %v631 = vsel %vm90, %v606, 0
    %v634 = vsel %vm90, %v607, 0
    %636 = vmatprep.subr.bf16.mxu0 0
    %637 = vmatpush1.bf16.msra.mxu0 0
    %638 = vmatprep.subr.bf16.mxu0 0
    %639 = vmatpush1.bf16.msra.mxu0 0
    %640 = vmatprep.subr.bf16.mxu0 0
    %641 = vmatpush1.bf16.msra.mxu0 0
    %642 = vmatprep.subr.bf16.mxu0 0
    %643 = vmatpush1.bf16.msra.mxu0 0
    %644 = vmatprep.subr.bf16.mxu0 0
    %645 = vmatpush1.bf16.msra.mxu0 0
    %646 = vmatprep.subr.bf16.mxu0 0
    %647 = vmatpush1.bf16.msra.mxu0 0
    %648 = vmatprep.subr.bf16.mxu0 0
    %649 = vmatpush1.bf16.msra.mxu0 %v621
    %650 = vmatprep.subr.bf16.mxu0 0
    %651 = vmatpush1.bf16.msra.mxu0 %v620
    %652 = vmatprep.subr.bf16.mxu0 0
    %653 = vmatpush2.bf16.msra.mxu0 0
    %654 = vmatprep.subr.bf16.mxu0 0
    %655 = vmatpush2.bf16.msra.mxu0 0
    %656 = vmatprep.subr.bf16.mxu0 0
    %657 = vmatpush2.bf16.msra.mxu0 0
    %658 = vmatprep.subr.bf16.mxu0 0
    %659 = vmatpush2.bf16.msra.mxu0 0
    %660 = vmatprep.subr.bf16.mxu0 0
    %661 = vmatpush2.bf16.msra.mxu0 0
    %662 = vmatprep.subr.bf16.mxu0 0
    %663 = vmatpush2.bf16.msra.mxu0 0
    %664 = vmatprep.subr.bf16.mxu0 0
    %665 = vmatpush2.bf16.msra.mxu0 0
    %666 = vmatprep.subr.bf16.mxu0 0
    %667 = vmatpush2.bf16.msra.mxu0 0
    %668 = vmatprep.mubr.bf16.mxu0 0
    %669 = vmatmul.mubr.bf16.gmra.mxu0 %v625
    %v670 = vpop.f32.mrf.mxu0
    %v671 = vadd.f32 0.0, %v670
    %v672 = vpop.f32.mrf.mxu0
    %v673 = vpop.f32.mrf.mxu0
    %v674 = vadd.f32 0.0, %v673
    %v675 = vpop.f32.mrf.mxu0
    %676 = vmatprep.mubr.bf16.mxu0 0
    %677 = vmatmul.mubr.bf16.gmra.mxu0 %v628
    %v678 = vpop.f32.mrf.mxu0
    %v679 = vadd.f32 0.0, %v678
    %v680 = vpop.f32.mrf.mxu0
    %v681 = vpop.f32.mrf.mxu0
    %v682 = vadd.f32 0.0, %v681
    %v683 = vpop.f32.mrf.mxu0
    %684 = vmatprep.mubr.bf16.mxu0 0
    %685 = vmatmul.mubr.bf16.gmra.mxu0 %v631
    %v686 = vpop.f32.mrf.mxu0
    %v687 = vadd.f32 0.0, %v686
    %v688 = vpop.f32.mrf.mxu0
    %v689 = vpop.f32.mrf.mxu0
    %v690 = vadd.f32 0.0, %v689
    %v691 = vpop.f32.mrf.mxu0
    %692 = vmatprep.mubr.bf16.mxu0 0
    %693 = vmatmul.mubr.bf16.gmra.mxu0 %v634
    %v694 = vpop.f32.mrf.mxu0
    %v695 = vadd.f32 0.0, %v694
    %v696 = vpop.f32.mrf.mxu0
    %v697 = vpop.f32.mrf.mxu0
    %v698 = vadd.f32 0.0, %v697
    %v699 = vpop.f32.mrf.mxu0
    %700 = vdwg.mxu0
    %v701 = vadd.f32 %v671, %v679
    %v702 = vadd.f32 %v674, %v682
    %v703 = vadd.f32 %v701, %v687
    %v704 = vadd.f32 %v702, %v690
    %v705 = vadd.f32 %v703, %v695
    %v706 = vadd.f32 %v704, %v698
    %v707 = vld [vmem:[%s12] sm:$0x1]
    %v709 = vlaneseq
    %v710 = vshrl.u32 %v709, 7
    %v711 = vsub.s32 0, %v710
    %v712 = vrot.slane %v707, %v711
    %v714 = vadd.f32 %v705, %v712
    %v715 = vadd.f32 %v706, %v712
    %v716 = vadd.f32 %v714, %v132
    %v717 = vadd.f32 %v715, %v133
    %v718 = vld [vmem:[%s13] sm:$0x1]
    %v719 = vld [vmem:[%s14] sm:$0x1]
    %v720 = vsel %vm90, %v716, 0.0
    %721 = vadd.xlane.f32.xlu0 %v720
    %v722 = vpop.xlane.xlu0 %721
    %v723 = vsel %vm90, %v717, 0.0
    %724 = vadd.xlane.f32.xlu0 %v723
    %v725 = vpop.xlane.xlu0 %724
    %v726 = vmul.f32 %v722, %v97
    %v727 = vmul.f32 %v725, %v97
    %v728 = vsub.f32 %v716, %v726
    %v729 = vsub.f32 %v717, %v727
    %v730 = vmul.f32 %v728, %v728
    %v731 = vmul.f32 %v729, %v729
    %v732 = vsel %vm90, %v730, 0.0
    %733 = vadd.xlane.f32.xlu0 %v732
    %v734 = vpop.xlane.xlu0 %733
    %v735 = vsel %vm90, %v731, 0.0
    %736 = vadd.xlane.f32.xlu0 %v735
    %v737 = vpop.xlane.xlu0 %736
    %v738 = vmul.f32 %v734, %v97
    %v739 = vmul.f32 %v737, %v97
    %v740 = vadd.f32 %v738, 1e-05
    %v741 = vadd.f32 %v739, 1e-05
    %v742 = vrsqrt.pop %v740
    %v743 = vrsqrt.pop %v741
    %v744 = vmul.f32 %v728, %v742
    %v745 = vmul.f32 %v729, %v743
    %v747 = vlaneseq
    %v748 = vshrl.u32 %v747, 7
    %v749 = vsub.s32 0, %v748
    %v750 = vrot.slane %v718, %v749
    %v752 = vmul.f32 %v744, %v750
    %v753 = vmul.f32 %v745, %v750
    %v755 = vlaneseq
    %v756 = vshrl.u32 %v755, 7
    %v757 = vsub.s32 0, %v756
    %v758 = vrot.slane %v719, %v757
    %v760 = vadd.f32 %v752, %v758
    %v761 = vadd.f32 %v753, %v758
    %v762 = vpack.c.bf16 %v761, %v760
    %v763 = vld [vmem:[%s15] sm:$0xf]
    %v764 = vld [vmem:[%s15 + $0x4] sm:$0xf]
    %v765 = vld [vmem:[%s15 + $0x8] sm:$0xf]
    %v766 = vld [vmem:[%s15 + $0xc] sm:$0xf]
    %v767 = vld [vmem:[%s16] sm:$0x1]
    %v769 = vlaneseq
    %v770 = vshrl.u32 %v769, 7
    %v771 = vsub.s32 0, %v770
    %v772 = vrot.slane %v767, %v771
    %v778 = vunpack.c.l.b16 %v763
    %v779 = vunpack.c.l.b16 %v764
    %v780 = vunpack.c.l.b16 %v765
    %v781 = vunpack.c.l.b16 %v766
    %v782 = vpack.c.b16 %v779, %v778
    %v783 = vpack.c.b16 %v781, %v780
    %v787 = vsel %vm90, %v762, 0
    %789 = vmatprep.subr.bf16.mxu0 0
    %790 = vmatpush1.bf16.msra.mxu0 0
    %791 = vmatprep.subr.bf16.mxu0 0
    %792 = vmatpush1.bf16.msra.mxu0 0
    %793 = vmatprep.subr.bf16.mxu0 0
    %794 = vmatpush1.bf16.msra.mxu0 0
    %795 = vmatprep.subr.bf16.mxu0 0
    %796 = vmatpush1.bf16.msra.mxu0 0
    %797 = vmatprep.subr.bf16.mxu0 0
    %798 = vmatpush1.bf16.msra.mxu0 0
    %799 = vmatprep.subr.bf16.mxu0 0
    %800 = vmatpush1.bf16.msra.mxu0 0
    %801 = vmatprep.subr.bf16.mxu0 0
    %802 = vmatpush1.bf16.msra.mxu0 %v783
    %803 = vmatprep.subr.bf16.mxu0 0
    %804 = vmatpush1.bf16.msra.mxu0 %v782
    %805 = vmatprep.subr.bf16.mxu0 0
    %806 = vmatpush2.bf16.msra.mxu0 0
    %807 = vmatprep.subr.bf16.mxu0 0
    %808 = vmatpush2.bf16.msra.mxu0 0
    %809 = vmatprep.subr.bf16.mxu0 0
    %810 = vmatpush2.bf16.msra.mxu0 0
    %811 = vmatprep.subr.bf16.mxu0 0
    %812 = vmatpush2.bf16.msra.mxu0 0
    %813 = vmatprep.subr.bf16.mxu0 0
    %814 = vmatpush2.bf16.msra.mxu0 0
    %815 = vmatprep.subr.bf16.mxu0 0
    %816 = vmatpush2.bf16.msra.mxu0 0
    %817 = vmatprep.subr.bf16.mxu0 0
    %818 = vmatpush2.bf16.msra.mxu0 0
    %819 = vmatprep.subr.bf16.mxu0 0
    %820 = vmatpush2.bf16.msra.mxu0 0
    %821 = vmatprep.mubr.bf16.mxu0 0
    %822 = vmatmul.mubr.bf16.gmra.mxu0 %v787
    %v823 = vpop.f32.mrf.mxu0
    %v824 = vadd.f32 %v772, %v823
    %v825 = vpop.f32.mrf.mxu0
    %v826 = vpop.f32.mrf.mxu0
    %v827 = vadd.f32 %v772, %v826
    %v828 = vpop.f32.mrf.mxu0
    %829 = vdwg.mxu0
    %v830 = vmul.f32 %v824, %v824
    %v831 = vmul.f32 %v827, %v827
    %v832 = vmul.f32 %v824, %v830
    %v833 = vmul.f32 %v827, %v831
    %v834 = vmul.f32 %v832, 0.044715
    %v835 = vmul.f32 %v833, 0.044715
    %v836 = vadd.f32 %v824, %v834
    %v837 = vadd.f32 %v827, %v835
    %v838 = vmul.f32 %v836, 0.7978846
    %v839 = vmul.f32 %v837, 0.7978846
    %v840 = vtanh.pop %v838
    %v841 = vtanh.pop %v839
    %v842 = vadd.f32 %v840, 1.0
    %v843 = vadd.f32 %v841, 1.0
    %v844 = vmul.f32 %v842, 0.5
    %v845 = vmul.f32 %v843, 0.5
    %v846 = vmul.f32 %v824, %v844
    %v847 = vmul.f32 %v827, %v845
    %v848 = vpack.c.bf16 %v847, %v846
    %v849 = vld [vmem:[%s17] sm:$0xf]
    %v850 = vld [vmem:[%s17 + $0x4] sm:$0xf]
    %v851 = vld [vmem:[%s17 + $0x8] sm:$0xf]
    %v852 = vld [vmem:[%s17 + $0xc] sm:$0xf]
    %v853 = vld [vmem:[%s17 + $0x10] sm:$0xf]
    %v854 = vld [vmem:[%s17 + $0x14] sm:$0xf]
    %v855 = vld [vmem:[%s17 + $0x18] sm:$0xf]
    %v856 = vld [vmem:[%s17 + $0x1c] sm:$0xf]
    %v857 = vld [vmem:[%s18] sm:$0x1]
    %v859 = vlaneseq
    %v860 = vshrl.u32 %v859, 7
    %v861 = vsub.s32 0, %v860
    %v862 = vrot.slane %v857, %v861
    %v872 = vunpack.c.l.b16 %v849
    %v873 = vunpack.c.l.b16 %v850
    %v874 = vunpack.c.l.b16 %v851
    %v875 = vunpack.c.l.b16 %v852
    %v876 = vunpack.c.l.b16 %v853
    %v877 = vunpack.c.l.b16 %v854
    %v878 = vunpack.c.l.b16 %v855
    %v879 = vunpack.c.l.b16 %v856
    %v880 = vpack.c.b16 %v873, %v872
    %v881 = vpack.c.b16 %v875, %v874
    %v882 = vpack.c.b16 %v877, %v876
    %v883 = vpack.c.b16 %v879, %v878
    %vm888 = vcmask 523264
    %v890 = vsel %vm888, %v848, 0
    %892 = vmatprep.subr.bf16.mxu0 0
    %893 = vmatpush1.bf16.msra.mxu0 0
    %894 = vmatprep.subr.bf16.mxu0 0
    %895 = vmatpush1.bf16.msra.mxu0 0
    %896 = vmatprep.subr.bf16.mxu0 0
    %897 = vmatpush1.bf16.msra.mxu0 0
    %898 = vmatprep.subr.bf16.mxu0 0
    %899 = vmatpush1.bf16.msra.mxu0 0
    %900 = vmatprep.subr.bf16.mxu0 0
    %901 = vmatpush1.bf16.msra.mxu0 %v883
    %902 = vmatprep.subr.bf16.mxu0 0
    %903 = vmatpush1.bf16.msra.mxu0 %v882
    %904 = vmatprep.subr.bf16.mxu0 0
    %905 = vmatpush1.bf16.msra.mxu0 %v881
    %906 = vmatprep.subr.bf16.mxu0 0
    %907 = vmatpush1.bf16.msra.mxu0 %v880
    %908 = vmatprep.subr.bf16.mxu0 0
    %909 = vmatpush2.bf16.msra.mxu0 0
    %910 = vmatprep.subr.bf16.mxu0 0
    %911 = vmatpush2.bf16.msra.mxu0 0
    %912 = vmatprep.subr.bf16.mxu0 0
    %913 = vmatpush2.bf16.msra.mxu0 0
    %914 = vmatprep.subr.bf16.mxu0 0
    %915 = vmatpush2.bf16.msra.mxu0 0
    %916 = vmatprep.subr.bf16.mxu0 0
    %917 = vmatpush2.bf16.msra.mxu0 0
    %918 = vmatprep.subr.bf16.mxu0 0
    %919 = vmatpush2.bf16.msra.mxu0 0
    %920 = vmatprep.subr.bf16.mxu0 0
    %921 = vmatpush2.bf16.msra.mxu0 0
    %922 = vmatprep.subr.bf16.mxu0 0
    %923 = vmatpush2.bf16.msra.mxu0 0
    %924 = vmatprep.mubr.bf16.mxu0 0
    %925 = vmatmul.mubr.bf16.gmra.mxu0 %v890
    %v926 = vpop.f32.mrf.mxu0
    %v927 = vadd.f32 %v862, %v926
    %v928 = vpop.f32.mrf.mxu0
    %v929 = vpop.f32.mrf.mxu0
    %v930 = vadd.f32 %v862, %v929
    %v931 = vpop.f32.mrf.mxu0
    %932 = vdwg.mxu0
    %v933 = vadd.f32 %v927, %v760
    %v934 = vadd.f32 %v930, %v761
    %v935 = vld [vmem:[%s19] sm:$0x1]
    %v936 = vld [vmem:[%s20] sm:$0x1]
    %v937 = vsel %vm90, %v933, 0.0
    %938 = vadd.xlane.f32.xlu0 %v937
    %v939 = vpop.xlane.xlu0 %938
    %v940 = vsel %vm90, %v934, 0.0
    %941 = vadd.xlane.f32.xlu0 %v940
    %v942 = vpop.xlane.xlu0 %941
    %v943 = vmul.f32 %v939, %v97
    %v944 = vmul.f32 %v942, %v97
    %v945 = vsub.f32 %v933, %v943
    %v946 = vsub.f32 %v934, %v944
    %v947 = vmul.f32 %v945, %v945
    %v948 = vmul.f32 %v946, %v946
    %v949 = vsel %vm90, %v947, 0.0
    %950 = vadd.xlane.f32.xlu0 %v949
    %v951 = vpop.xlane.xlu0 %950
    %v952 = vsel %vm90, %v948, 0.0
    %953 = vadd.xlane.f32.xlu0 %v952
    %v954 = vpop.xlane.xlu0 %953
    %v955 = vmul.f32 %v951, %v97
    %v956 = vmul.f32 %v954, %v97
    %v957 = vadd.f32 %v955, 1e-05
    %v958 = vadd.f32 %v956, 1e-05
    %v959 = vrsqrt.pop %v957
    %v960 = vrsqrt.pop %v958
    %v961 = vmul.f32 %v945, %v959
    %v962 = vmul.f32 %v946, %v960
    %v964 = vlaneseq
    %v965 = vshrl.u32 %v964, 7
    %v966 = vsub.s32 0, %v965
    %v967 = vrot.slane %v935, %v966
    %v969 = vmul.f32 %v961, %v967
    %v970 = vmul.f32 %v962, %v967
    %v972 = vlaneseq
    %v973 = vshrl.u32 %v972, 7
    %v974 = vsub.s32 0, %v973
    %v975 = vrot.slane %v936, %v974
    %v977 = vadd.f32 %v969, %v975
    %v978 = vadd.f32 %v970, %v975
    %v979 = vpack.c.bf16 %v978, %v977
    %s980 = scalar_lea.vmem %s5, 16
    %v981 = vld [vmem:[%s980] sm:$0xf]
    %v982 = vld [vmem:[%s980 + $0x4] sm:$0xf]
    %v983 = vld [vmem:[%s980 + $0x8] sm:$0xf]
    %v984 = vld [vmem:[%s980 + $0xc] sm:$0xf]
    %s985 = scalar_lea.vmem %s6, 1
    %v986 = vld [vmem:[%s985] sm:$0x1]
    %v988 = vlaneseq
    %v989 = vshrl.u32 %v988, 7
    %v990 = vsub.s32 0, %v989
    %v991 = vrot.slane %v986, %v990
    %v997 = vunpack.c.l.b16 %v981
    %v998 = vunpack.c.l.b16 %v982
    %v999 = vunpack.c.l.b16 %v983
    %v1000 = vunpack.c.l.b16 %v984
    %v1001 = vpack.c.b16 %v998, %v997
    %v1002 = vpack.c.b16 %v1000, %v999
    %v1006 = vsel %vm90, %v979, 0
    %1008 = vmatprep.subr.bf16.mxu0 0
    %1009 = vmatpush1.bf16.msra.mxu0 0
    %1010 = vmatprep.subr.bf16.mxu0 0
    %1011 = vmatpush1.bf16.msra.mxu0 0
    %1012 = vmatprep.subr.bf16.mxu0 0
    %1013 = vmatpush1.bf16.msra.mxu0 0
    %1014 = vmatprep.subr.bf16.mxu0 0
    %1015 = vmatpush1.bf16.msra.mxu0 0
    %1016 = vmatprep.subr.bf16.mxu0 0
    %1017 = vmatpush1.bf16.msra.mxu0 0
    %1018 = vmatprep.subr.bf16.mxu0 0
    %1019 = vmatpush1.bf16.msra.mxu0 0
    %1020 = vmatprep.subr.bf16.mxu0 0
    %1021 = vmatpush1.bf16.msra.mxu0 %v1002
    %1022 = vmatprep.subr.bf16.mxu0 0
    %1023 = vmatpush1.bf16.msra.mxu0 %v1001
    %1024 = vmatprep.subr.bf16.mxu0 0
    %1025 = vmatpush2.bf16.msra.mxu0 0
    %1026 = vmatprep.subr.bf16.mxu0 0
    %1027 = vmatpush2.bf16.msra.mxu0 0
    %1028 = vmatprep.subr.bf16.mxu0 0
    %1029 = vmatpush2.bf16.msra.mxu0 0
    %1030 = vmatprep.subr.bf16.mxu0 0
    %1031 = vmatpush2.bf16.msra.mxu0 0
    %1032 = vmatprep.subr.bf16.mxu0 0
    %1033 = vmatpush2.bf16.msra.mxu0 0
    %1034 = vmatprep.subr.bf16.mxu0 0
    %1035 = vmatpush2.bf16.msra.mxu0 0
    %1036 = vmatprep.subr.bf16.mxu0 0
    %1037 = vmatpush2.bf16.msra.mxu0 0
    %1038 = vmatprep.subr.bf16.mxu0 0
    %1039 = vmatpush2.bf16.msra.mxu0 0
    %1040 = vmatprep.mubr.bf16.mxu0 0
    %1041 = vmatmul.mubr.bf16.gmra.mxu0 %v1006
    %v1042 = vpop.f32.mrf.mxu0
    %v1043 = vadd.f32 %v991, %v1042
    %v1044 = vpop.f32.mrf.mxu0
    %v1045 = vpop.f32.mrf.mxu0
    %v1046 = vadd.f32 %v991, %v1045
    %v1047 = vpop.f32.mrf.mxu0
    %1048 = vdwg.mxu0
    %v1049 = vmul.f32 %v1043, 0.35355338
    %v1050 = vmul.f32 %v1046, 0.35355338
    %s1051 = scalar_lea.vmem %s7, 16
    %v1052 = vld [vmem:[%s1051] sm:$0xf]
    %v1053 = vld [vmem:[%s1051 + $0x4] sm:$0xf]
    %v1054 = vld [vmem:[%s1051 + $0x8] sm:$0xf]
    %v1055 = vld [vmem:[%s1051 + $0xc] sm:$0xf]
    %s1056 = scalar_lea.vmem %s8, 1
    %v1057 = vld [vmem:[%s1056] sm:$0x1]
    %v1059 = vlaneseq
    %v1060 = vshrl.u32 %v1059, 7
    %v1061 = vsub.s32 0, %v1060
    %v1062 = vrot.slane %v1057, %v1061
    %v1068 = vunpack.c.l.b16 %v1052
    %v1069 = vunpack.c.l.b16 %v1053
    %v1070 = vunpack.c.l.b16 %v1054
    %v1071 = vunpack.c.l.b16 %v1055
    %v1072 = vpack.c.b16 %v1069, %v1068
    %v1073 = vpack.c.b16 %v1071, %v1070
    %1076 = vmatprep.subr.bf16.mxu0 0
    %1077 = vmatpush1.bf16.msra.mxu0 0
    %1078 = vmatprep.subr.bf16.mxu0 0
    %1079 = vmatpush1.bf16.msra.mxu0 0
    %1080 = vmatprep.subr.bf16.mxu0 0
    %1081 = vmatpush1.bf16.msra.mxu0 0
    %1082 = vmatprep.subr.bf16.mxu0 0
    %1083 = vmatpush1.bf16.msra.mxu0 0
    %1084 = vmatprep.subr.bf16.mxu0 0
    %1085 = vmatpush1.bf16.msra.mxu0 0
    %1086 = vmatprep.subr.bf16.mxu0 0
    %1087 = vmatpush1.bf16.msra.mxu0 0
    %1088 = vmatprep.subr.bf16.mxu0 0
    %1089 = vmatpush1.bf16.msra.mxu0 %v1073
    %1090 = vmatprep.subr.bf16.mxu0 0
    %1091 = vmatpush1.bf16.msra.mxu0 %v1072
    %1092 = vmatprep.subr.bf16.mxu0 0
    %1093 = vmatpush2.bf16.msra.mxu0 0
    %1094 = vmatprep.subr.bf16.mxu0 0
    %1095 = vmatpush2.bf16.msra.mxu0 0
    %1096 = vmatprep.subr.bf16.mxu0 0
    %1097 = vmatpush2.bf16.msra.mxu0 0
    %1098 = vmatprep.subr.bf16.mxu0 0
    %1099 = vmatpush2.bf16.msra.mxu0 0
    %1100 = vmatprep.subr.bf16.mxu0 0
    %1101 = vmatpush2.bf16.msra.mxu0 0
    %1102 = vmatprep.subr.bf16.mxu0 0
    %1103 = vmatpush2.bf16.msra.mxu0 0
    %1104 = vmatprep.subr.bf16.mxu0 0
    %1105 = vmatpush2.bf16.msra.mxu0 0
    %1106 = vmatprep.subr.bf16.mxu0 0
    %1107 = vmatpush2.bf16.msra.mxu0 0
    %1108 = vmatprep.mubr.bf16.mxu0 0
    %1109 = vmatmul.mubr.bf16.gmra.mxu0 %v1006
    %v1110 = vpop.f32.mrf.mxu0
    %v1111 = vadd.f32 %v1062, %v1110
    %v1112 = vpop.f32.mrf.mxu0
    %v1113 = vpop.f32.mrf.mxu0
    %v1114 = vadd.f32 %v1062, %v1113
    %v1115 = vpop.f32.mrf.mxu0
    %1116 = vdwg.mxu0
    %s1117 = scalar_lea.vmem %s9, 16
    %v1118 = vld [vmem:[%s1117] sm:$0xf]
    %v1119 = vld [vmem:[%s1117 + $0x4] sm:$0xf]
    %v1120 = vld [vmem:[%s1117 + $0x8] sm:$0xf]
    %v1121 = vld [vmem:[%s1117 + $0xc] sm:$0xf]
    %s1122 = scalar_lea.vmem %s10, 1
    %v1123 = vld [vmem:[%s1122] sm:$0x1]
    %v1125 = vlaneseq
    %v1126 = vshrl.u32 %v1125, 7
    %v1127 = vsub.s32 0, %v1126
    %v1128 = vrot.slane %v1123, %v1127
    %v1134 = vunpack.c.l.b16 %v1118
    %v1135 = vunpack.c.l.b16 %v1119
    %v1136 = vunpack.c.l.b16 %v1120
    %v1137 = vunpack.c.l.b16 %v1121
    %v1138 = vpack.c.b16 %v1135, %v1134
    %v1139 = vpack.c.b16 %v1137, %v1136
    %1142 = vmatprep.subr.bf16.mxu0 0
    %1143 = vmatpush1.bf16.msra.mxu0 0
    %1144 = vmatprep.subr.bf16.mxu0 0
    %1145 = vmatpush1.bf16.msra.mxu0 0
    %1146 = vmatprep.subr.bf16.mxu0 0
    %1147 = vmatpush1.bf16.msra.mxu0 0
    %1148 = vmatprep.subr.bf16.mxu0 0
    %1149 = vmatpush1.bf16.msra.mxu0 0
    %1150 = vmatprep.subr.bf16.mxu0 0
    %1151 = vmatpush1.bf16.msra.mxu0 0
    %1152 = vmatprep.subr.bf16.mxu0 0
    %1153 = vmatpush1.bf16.msra.mxu0 0
    %1154 = vmatprep.subr.bf16.mxu0 0
    %1155 = vmatpush1.bf16.msra.mxu0 %v1139
    %1156 = vmatprep.subr.bf16.mxu0 0
    %1157 = vmatpush1.bf16.msra.mxu0 %v1138
    %1158 = vmatprep.subr.bf16.mxu0 0
    %1159 = vmatpush2.bf16.msra.mxu0 0
    %1160 = vmatprep.subr.bf16.mxu0 0
    %1161 = vmatpush2.bf16.msra.mxu0 0
    %1162 = vmatprep.subr.bf16.mxu0 0
    %1163 = vmatpush2.bf16.msra.mxu0 0
    %1164 = vmatprep.subr.bf16.mxu0 0
    %1165 = vmatpush2.bf16.msra.mxu0 0
    %1166 = vmatprep.subr.bf16.mxu0 0
    %1167 = vmatpush2.bf16.msra.mxu0 0
    %1168 = vmatprep.subr.bf16.mxu0 0
    %1169 = vmatpush2.bf16.msra.mxu0 0
    %1170 = vmatprep.subr.bf16.mxu0 0
    %1171 = vmatpush2.bf16.msra.mxu0 0
    %1172 = vmatprep.subr.bf16.mxu0 0
    %1173 = vmatpush2.bf16.msra.mxu0 0
    %1174 = vmatprep.mubr.bf16.mxu0 0
    %1175 = vmatmul.mubr.bf16.gmra.mxu0 %v1006
    %v1176 = vpop.f32.mrf.mxu0
    %v1177 = vadd.f32 %v1128, %v1176
    %v1178 = vpop.f32.mrf.mxu0
    %v1179 = vpop.f32.mrf.mxu0
    %v1180 = vadd.f32 %v1128, %v1179
    %v1181 = vpop.f32.mrf.mxu0
    %1182 = vdwg.mxu0
    %v1183 = vmul.f32 %v1049, %v70
    %v1184 = vmul.f32 %v1050, %v71
    %v1185 = vmul.f32 %v1049, %v72
    %v1186 = vmul.f32 %v1050, %v73
    %v1187 = vmul.f32 %v1049, %v74
    %v1188 = vmul.f32 %v1050, %v75
    %v1189 = vmul.f32 %v1049, %v76
    %v1190 = vmul.f32 %v1050, %v77
    %v1191 = vpack.c.bf16 %v1184, %v1183
    %v1192 = vpack.c.bf16 %v1186, %v1185
    %v1193 = vpack.c.bf16 %v1188, %v1187
    %v1194 = vpack.c.bf16 %v1190, %v1189
    %v1195 = vpack.c.bf16 %v1114, %v1111
    %v1197 = vsel %vm90, %v1191, 0
    %v1200 = vsel %vm90, %v1192, 0
    %v1203 = vsel %vm90, %v1193, 0
    %v1206 = vsel %vm90, %v1194, 0
    %v1209 = vsel %vm90, %v1195, 0
    %1211 = vmatprep.subr.bf16.mxu0 0
    %1212 = vmatpush1.bf16.xpose.msra.mxu0 0
    %1213 = vmatprep.subr.bf16.mxu0 0
    %1214 = vmatpush1.bf16.xpose.msra.mxu0 0
    %1215 = vmatprep.subr.bf16.mxu0 0
    %1216 = vmatpush1.bf16.xpose.msra.mxu0 0
    %1217 = vmatprep.subr.bf16.mxu0 0
    %1218 = vmatpush1.bf16.xpose.msra.mxu0 0
    %1219 = vmatprep.subr.bf16.mxu0 0
    %1220 = vmatpush1.bf16.xpose.msra.mxu0 0
    %1221 = vmatprep.subr.bf16.mxu0 0
    %1222 = vmatpush1.bf16.xpose.msra.mxu0 0
    %1223 = vmatprep.subr.bf16.mxu0 0
    %1224 = vmatpush1.bf16.xpose.msra.mxu0 0
    %1225 = vmatprep.subr.bf16.mxu0 0
    %1226 = vmatpush1.bf16.xpose.msra.mxu0 %v1209
    %1227 = vmatprep.subr.bf16.mxu0 0
    %1228 = vmatpush2.bf16.xpose.msra.mxu0 0
    %1229 = vmatprep.subr.bf16.mxu0 0
    %1230 = vmatpush2.bf16.xpose.msra.mxu0 0
    %1231 = vmatprep.subr.bf16.mxu0 0
    %1232 = vmatpush2.bf16.xpose.msra.mxu0 0
    %1233 = vmatprep.subr.bf16.mxu0 0
    %1234 = vmatpush2.bf16.xpose.msra.mxu0 0
    %1235 = vmatprep.subr.bf16.mxu0 0
    %1236 = vmatpush2.bf16.xpose.msra.mxu0 0
    %1237 = vmatprep.subr.bf16.mxu0 0
    %1238 = vmatpush2.bf16.xpose.msra.mxu0 0
    %1239 = vmatprep.subr.bf16.mxu0 0
    %1240 = vmatpush2.bf16.xpose.msra.mxu0 0
    %1241 = vmatprep.subr.bf16.mxu0 0
    %1242 = vmatpush2.bf16.xpose.msra.mxu0 0
    %1243 = vmatprep.mubr.bf16.mxu0 0
    %1244 = vmatmul.mubr.bf16.gmra.mxu0 %v1197
    %v1245 = vpop.f32.mrf.mxu0
    %v1246 = vadd.f32 %v78, %v1245
    %v1247 = vpop.f32.mrf.mxu0
    %v1248 = vpop.f32.mrf.mxu0
    %v1249 = vadd.f32 %v79, %v1248
    %v1250 = vpop.f32.mrf.mxu0
    %1251 = vmatprep.mubr.bf16.mxu0 0
    %1252 = vmatmul.mubr.bf16.gmra.mxu0 %v1200
    %v1253 = vpop.f32.mrf.mxu0
    %v1254 = vadd.f32 %v80, %v1253
    %v1255 = vpop.f32.mrf.mxu0
    %v1256 = vpop.f32.mrf.mxu0
    %v1257 = vadd.f32 %v81, %v1256
    %v1258 = vpop.f32.mrf.mxu0
    %1259 = vmatprep.mubr.bf16.mxu0 0
    %1260 = vmatmul.mubr.bf16.gmra.mxu0 %v1203
    %v1261 = vpop.f32.mrf.mxu0
    %v1262 = vadd.f32 %v82, %v1261
    %v1263 = vpop.f32.mrf.mxu0
    %v1264 = vpop.f32.mrf.mxu0
    %v1265 = vadd.f32 %v83, %v1264
    %v1266 = vpop.f32.mrf.mxu0
    %1267 = vmatprep.mubr.bf16.mxu0 0
    %1268 = vmatmul.mubr.bf16.gmra.mxu0 %v1206
    %v1269 = vpop.f32.mrf.mxu0
    %v1270 = vadd.f32 %v84, %v1269
    %v1271 = vpop.f32.mrf.mxu0
    %v1272 = vpop.f32.mrf.mxu0
    %v1273 = vadd.f32 %v85, %v1272
    %v1274 = vpop.f32.mrf.mxu0
    %1275 = vdwg.mxu0
    %v1276 = vsel %vm425, %v1246, -inf
    %1277 = vmax.xlane.f32.xlu0 %v1276
    %v1278 = vpop.xlane.xlu0 %1277
    %v1279 = vsel %vm425, %v1249, -inf
    %1280 = vmax.xlane.f32.xlu0 %v1279
    %v1281 = vpop.xlane.xlu0 %1280
    %v1282 = vsel %vm425, %v1254, -inf
    %1283 = vmax.xlane.f32.xlu0 %v1282
    %v1284 = vpop.xlane.xlu0 %1283
    %v1285 = vsel %vm425, %v1257, -inf
    %1286 = vmax.xlane.f32.xlu0 %v1285
    %v1287 = vpop.xlane.xlu0 %1286
    %v1288 = vsel %vm425, %v1262, -inf
    %1289 = vmax.xlane.f32.xlu0 %v1288
    %v1290 = vpop.xlane.xlu0 %1289
    %v1291 = vsel %vm425, %v1265, -inf
    %1292 = vmax.xlane.f32.xlu0 %v1291
    %v1293 = vpop.xlane.xlu0 %1292
    %v1294 = vsel %vm425, %v1270, -inf
    %1295 = vmax.xlane.f32.xlu0 %v1294
    %v1296 = vpop.xlane.xlu0 %1295
    %v1297 = vsel %vm425, %v1273, -inf
    %1298 = vmax.xlane.f32.xlu0 %v1297
    %v1299 = vpop.xlane.xlu0 %1298
    %v1300 = vsub.f32 %v1246, %v1278
    %v1301 = vsub.f32 %v1249, %v1281
    %v1302 = vsub.f32 %v1254, %v1284
    %v1303 = vsub.f32 %v1257, %v1287
    %v1304 = vsub.f32 %v1262, %v1290
    %v1305 = vsub.f32 %v1265, %v1293
    %v1306 = vsub.f32 %v1270, %v1296
    %v1307 = vsub.f32 %v1273, %v1299
    %v1308 = vmul.f32 %v1300, 1.442695
    %v1309 = vpow.pop %v1308
    %v1310 = vmul.f32 %v1301, 1.442695
    %v1311 = vpow.pop %v1310
    %v1312 = vmul.f32 %v1302, 1.442695
    %v1313 = vpow.pop %v1312
    %v1314 = vmul.f32 %v1303, 1.442695
    %v1315 = vpow.pop %v1314
    %v1316 = vmul.f32 %v1304, 1.442695
    %v1317 = vpow.pop %v1316
    %v1318 = vmul.f32 %v1305, 1.442695
    %v1319 = vpow.pop %v1318
    %v1320 = vmul.f32 %v1306, 1.442695
    %v1321 = vpow.pop %v1320
    %v1322 = vmul.f32 %v1307, 1.442695
    %v1323 = vpow.pop %v1322
    %v1324 = vsel %vm425, %v1309, 0.0
    %1325 = vadd.xlane.f32.xlu0 %v1324
    %v1326 = vpop.xlane.xlu0 %1325
    %v1327 = vsel %vm425, %v1311, 0.0
    %1328 = vadd.xlane.f32.xlu0 %v1327
    %v1329 = vpop.xlane.xlu0 %1328
    %v1330 = vsel %vm425, %v1313, 0.0
    %1331 = vadd.xlane.f32.xlu0 %v1330
    %v1332 = vpop.xlane.xlu0 %1331
    %v1333 = vsel %vm425, %v1315, 0.0
    %1334 = vadd.xlane.f32.xlu0 %v1333
    %v1335 = vpop.xlane.xlu0 %1334
    %v1336 = vsel %vm425, %v1317, 0.0
    %1337 = vadd.xlane.f32.xlu0 %v1336
    %v1338 = vpop.xlane.xlu0 %1337
    %v1339 = vsel %vm425, %v1319, 0.0
    %1340 = vadd.xlane.f32.xlu0 %v1339
    %v1341 = vpop.xlane.xlu0 %1340
    %v1342 = vsel %vm425, %v1321, 0.0
    %1343 = vadd.xlane.f32.xlu0 %v1342
    %v1344 = vpop.xlane.xlu0 %1343
    %v1345 = vsel %vm425, %v1323, 0.0
    %1346 = vadd.xlane.f32.xlu0 %v1345
    %v1347 = vpop.xlane.xlu0 %1346
    %v1348 = vrcp.pop %v1326
    %v1349 = vrcp.pop %v1329
    %v1350 = vrcp.pop %v1332
    %v1351 = vrcp.pop %v1335
    %v1352 = vrcp.pop %v1338
    %v1353 = vrcp.pop %v1341
    %v1354 = vrcp.pop %v1344
    %v1355 = vrcp.pop %v1347
    %v1356 = vmul.f32 %v1309, %v1348
    %v1357 = vmul.f32 %v1311, %v1349
    %v1358 = vmul.f32 %v1313, %v1350
    %v1359 = vmul.f32 %v1315, %v1351
    %v1360 = vmul.f32 %v1317, %v1352
    %v1361 = vmul.f32 %v1319, %v1353
    %v1362 = vmul.f32 %v1321, %v1354
    %v1363 = vmul.f32 %v1323, %v1355
    %v1364 = vpack.c.bf16 %v1357, %v1356
    %v1365 = vpack.c.bf16 %v1359, %v1358
    %v1366 = vpack.c.bf16 %v1361, %v1360
    %v1367 = vpack.c.bf16 %v1363, %v1362
    %v1368 = vpack.c.bf16 %v1180, %v1177
    %v1370 = vsel %vm425, %v1364, 0
    %v1373 = vsel %vm425, %v1365, 0
    %v1376 = vsel %vm425, %v1366, 0
    %v1379 = vsel %vm425, %v1367, 0
    %1381 = vmatprep.subr.bf16.mxu0 0
    %1382 = vmatpush1.bf16.msra.mxu0 0
    %1383 = vmatprep.subr.bf16.mxu0 0
    %1384 = vmatpush1.bf16.msra.mxu0 0
    %1385 = vmatprep.subr.bf16.mxu0 0
    %1386 = vmatpush1.bf16.msra.mxu0 0
    %1387 = vmatprep.subr.bf16.mxu0 0
    %1388 = vmatpush1.bf16.msra.mxu0 0
    %1389 = vmatprep.subr.bf16.mxu0 0
    %1390 = vmatpush1.bf16.msra.mxu0 0
    %1391 = vmatprep.subr.bf16.mxu0 0
    %1392 = vmatpush1.bf16.msra.mxu0 0
    %1393 = vmatprep.subr.bf16.mxu0 0
    %1394 = vmatpush1.bf16.msra.mxu0 0
    %1395 = vmatprep.subr.bf16.mxu0 0
    %1396 = vmatpush1.bf16.msra.mxu0 %v1368
    %1397 = vmatprep.subr.bf16.mxu0 0
    %1398 = vmatpush2.bf16.msra.mxu0 0
    %1399 = vmatprep.subr.bf16.mxu0 0
    %1400 = vmatpush2.bf16.msra.mxu0 0
    %1401 = vmatprep.subr.bf16.mxu0 0
    %1402 = vmatpush2.bf16.msra.mxu0 0
    %1403 = vmatprep.subr.bf16.mxu0 0
    %1404 = vmatpush2.bf16.msra.mxu0 0
    %1405 = vmatprep.subr.bf16.mxu0 0
    %1406 = vmatpush2.bf16.msra.mxu0 0
    %1407 = vmatprep.subr.bf16.mxu0 0
    %1408 = vmatpush2.bf16.msra.mxu0 0
    %1409 = vmatprep.subr.bf16.mxu0 0
    %1410 = vmatpush2.bf16.msra.mxu0 0
    %1411 = vmatprep.subr.bf16.mxu0 0
    %1412 = vmatpush2.bf16.msra.mxu0 0
    %1413 = vmatprep.mubr.bf16.mxu0 0
    %1414 = vmatmul.mubr.bf16.gmra.mxu0 %v1370
    %v1415 = vpop.f32.mrf.mxu0
    %v1416 = vadd.f32 0.0, %v1415
    %v1417 = vpop.f32.mrf.mxu0
    %v1418 = vpop.f32.mrf.mxu0
    %v1419 = vadd.f32 0.0, %v1418
    %v1420 = vpop.f32.mrf.mxu0
    %1421 = vmatprep.mubr.bf16.mxu0 0
    %1422 = vmatmul.mubr.bf16.gmra.mxu0 %v1373
    %v1423 = vpop.f32.mrf.mxu0
    %v1424 = vadd.f32 0.0, %v1423
    %v1425 = vpop.f32.mrf.mxu0
    %v1426 = vpop.f32.mrf.mxu0
    %v1427 = vadd.f32 0.0, %v1426
    %v1428 = vpop.f32.mrf.mxu0
    %1429 = vmatprep.mubr.bf16.mxu0 0
    %1430 = vmatmul.mubr.bf16.gmra.mxu0 %v1376
    %v1431 = vpop.f32.mrf.mxu0
    %v1432 = vadd.f32 0.0, %v1431
    %v1433 = vpop.f32.mrf.mxu0
    %v1434 = vpop.f32.mrf.mxu0
    %v1435 = vadd.f32 0.0, %v1434
    %v1436 = vpop.f32.mrf.mxu0
    %1437 = vmatprep.mubr.bf16.mxu0 0
    %1438 = vmatmul.mubr.bf16.gmra.mxu0 %v1379
    %v1439 = vpop.f32.mrf.mxu0
    %v1440 = vadd.f32 0.0, %v1439
    %v1441 = vpop.f32.mrf.mxu0
    %v1442 = vpop.f32.mrf.mxu0
    %v1443 = vadd.f32 0.0, %v1442
    %v1444 = vpop.f32.mrf.mxu0
    %1445 = vdwg.mxu0
    %v1446 = vmul.f32 %v1416, %v70
    %v1447 = vmul.f32 %v1419, %v71
    %v1448 = vmul.f32 %v1424, %v72
    %v1449 = vmul.f32 %v1427, %v73
    %v1450 = vmul.f32 %v1432, %v74
    %v1451 = vmul.f32 %v1435, %v75
    %v1452 = vmul.f32 %v1440, %v76
    %v1453 = vmul.f32 %v1443, %v77
    %v1454 = vpack.c.bf16 %v1447, %v1446
    %v1455 = vpack.c.bf16 %v1449, %v1448
    %v1456 = vpack.c.bf16 %v1451, %v1450
    %v1457 = vpack.c.bf16 %v1453, %v1452
    %s1458 = scalar_lea.vmem %s11, 16
    %v1459 = vld [vmem:[%s1458] sm:$0xf]
    %v1460 = vld [vmem:[%s1458 + $0x4] sm:$0xf]
    %v1461 = vld [vmem:[%s1458 + $0x8] sm:$0xf]
    %v1462 = vld [vmem:[%s1458 + $0xc] sm:$0xf]
    %v1467 = vunpack.c.l.b16 %v1459
    %v1468 = vunpack.c.l.b16 %v1460
    %v1469 = vunpack.c.l.b16 %v1461
    %v1470 = vunpack.c.l.b16 %v1462
    %v1471 = vpack.c.b16 %v1468, %v1467
    %v1472 = vpack.c.b16 %v1470, %v1469
    %v1476 = vsel %vm90, %v1454, 0
    %v1479 = vsel %vm90, %v1455, 0
    %v1482 = vsel %vm90, %v1456, 0
    %v1485 = vsel %vm90, %v1457, 0
    %1487 = vmatprep.subr.bf16.mxu0 0
    %1488 = vmatpush1.bf16.msra.mxu0 0
    %1489 = vmatprep.subr.bf16.mxu0 0
    %1490 = vmatpush1.bf16.msra.mxu0 0
    %1491 = vmatprep.subr.bf16.mxu0 0
    %1492 = vmatpush1.bf16.msra.mxu0 0
    %1493 = vmatprep.subr.bf16.mxu0 0
    %1494 = vmatpush1.bf16.msra.mxu0 0
    %1495 = vmatprep.subr.bf16.mxu0 0
    %1496 = vmatpush1.bf16.msra.mxu0 0
    %1497 = vmatprep.subr.bf16.mxu0 0
    %1498 = vmatpush1.bf16.msra.mxu0 0
    %1499 = vmatprep.subr.bf16.mxu0 0
    %1500 = vmatpush1.bf16.msra.mxu0 %v1472
    %1501 = vmatprep.subr.bf16.mxu0 0
    %1502 = vmatpush1.bf16.msra.mxu0 %v1471
    %1503 = vmatprep.subr.bf16.mxu0 0
    %1504 = vmatpush2.bf16.msra.mxu0 0
    %1505 = vmatprep.subr.bf16.mxu0 0
    %1506 = vmatpush2.bf16.msra.mxu0 0
    %1507 = vmatprep.subr.bf16.mxu0 0
    %1508 = vmatpush2.bf16.msra.mxu0 0
    %1509 = vmatprep.subr.bf16.mxu0 0
    %1510 = vmatpush2.bf16.msra.mxu0 0
    %1511 = vmatprep.subr.bf16.mxu0 0
    %1512 = vmatpush2.bf16.msra.mxu0 0
    %1513 = vmatprep.subr.bf16.mxu0 0
    %1514 = vmatpush2.bf16.msra.mxu0 0
    %1515 = vmatprep.subr.bf16.mxu0 0
    %1516 = vmatpush2.bf16.msra.mxu0 0
    %1517 = vmatprep.subr.bf16.mxu0 0
    %1518 = vmatpush2.bf16.msra.mxu0 0
    %1519 = vmatprep.mubr.bf16.mxu0 0
    %1520 = vmatmul.mubr.bf16.gmra.mxu0 %v1476
    %v1521 = vpop.f32.mrf.mxu0
    %v1522 = vadd.f32 0.0, %v1521
    %v1523 = vpop.f32.mrf.mxu0
    %v1524 = vpop.f32.mrf.mxu0
    %v1525 = vadd.f32 0.0, %v1524
    %v1526 = vpop.f32.mrf.mxu0
    %1527 = vmatprep.mubr.bf16.mxu0 0
    %1528 = vmatmul.mubr.bf16.gmra.mxu0 %v1479
    %v1529 = vpop.f32.mrf.mxu0
    %v1530 = vadd.f32 0.0, %v1529
    %v1531 = vpop.f32.mrf.mxu0
    %v1532 = vpop.f32.mrf.mxu0
    %v1533 = vadd.f32 0.0, %v1532
    %v1534 = vpop.f32.mrf.mxu0
    %1535 = vmatprep.mubr.bf16.mxu0 0
    %1536 = vmatmul.mubr.bf16.gmra.mxu0 %v1482
    %v1537 = vpop.f32.mrf.mxu0
    %v1538 = vadd.f32 0.0, %v1537
    %v1539 = vpop.f32.mrf.mxu0
    %v1540 = vpop.f32.mrf.mxu0
    %v1541 = vadd.f32 0.0, %v1540
    %v1542 = vpop.f32.mrf.mxu0
    %1543 = vmatprep.mubr.bf16.mxu0 0
    %1544 = vmatmul.mubr.bf16.gmra.mxu0 %v1485
    %v1545 = vpop.f32.mrf.mxu0
    %v1546 = vadd.f32 0.0, %v1545
    %v1547 = vpop.f32.mrf.mxu0
    %v1548 = vpop.f32.mrf.mxu0
    %v1549 = vadd.f32 0.0, %v1548
    %v1550 = vpop.f32.mrf.mxu0
    %1551 = vdwg.mxu0
    %v1552 = vadd.f32 %v1522, %v1530
    %v1553 = vadd.f32 %v1525, %v1533
    %v1554 = vadd.f32 %v1552, %v1538
    %v1555 = vadd.f32 %v1553, %v1541
    %v1556 = vadd.f32 %v1554, %v1546
    %v1557 = vadd.f32 %v1555, %v1549
    %s1558 = scalar_lea.vmem %s12, 1
    %v1559 = vld [vmem:[%s1558] sm:$0x1]
    %v1561 = vlaneseq
    %v1562 = vshrl.u32 %v1561, 7
    %v1563 = vsub.s32 0, %v1562
    %v1564 = vrot.slane %v1559, %v1563
    %v1566 = vadd.f32 %v1556, %v1564
    %v1567 = vadd.f32 %v1557, %v1564
    %v1568 = vadd.f32 %v1566, %v977
    %v1569 = vadd.f32 %v1567, %v978
    %s1570 = scalar_lea.vmem %s13, 1
    %v1571 = vld [vmem:[%s1570] sm:$0x1]
    %s1572 = scalar_lea.vmem %s14, 1
    %v1573 = vld [vmem:[%s1572] sm:$0x1]
    %v1574 = vsel %vm90, %v1568, 0.0
    %1575 = vadd.xlane.f32.xlu0 %v1574
    %v1576 = vpop.xlane.xlu0 %1575
    %v1577 = vsel %vm90, %v1569, 0.0
    %1578 = vadd.xlane.f32.xlu0 %v1577
    %v1579 = vpop.xlane.xlu0 %1578
    %v1580 = vmul.f32 %v1576, %v97
    %v1581 = vmul.f32 %v1579, %v97
    %v1582 = vsub.f32 %v1568, %v1580
    %v1583 = vsub.f32 %v1569, %v1581
    %v1584 = vmul.f32 %v1582, %v1582
    %v1585 = vmul.f32 %v1583, %v1583
    %v1586 = vsel %vm90, %v1584, 0.0
    %1587 = vadd.xlane.f32.xlu0 %v1586
    %v1588 = vpop.xlane.xlu0 %1587
    %v1589 = vsel %vm90, %v1585, 0.0
    %1590 = vadd.xlane.f32.xlu0 %v1589
    %v1591 = vpop.xlane.xlu0 %1590
    %v1592 = vmul.f32 %v1588, %v97
    %v1593 = vmul.f32 %v1591, %v97
    %v1594 = vadd.f32 %v1592, 1e-05
    %v1595 = vadd.f32 %v1593, 1e-05
    %v1596 = vrsqrt.pop %v1594
    %v1597 = vrsqrt.pop %v1595
    %v1598 = vmul.f32 %v1582, %v1596
    %v1599 = vmul.f32 %v1583, %v1597
    %v1601 = vlaneseq
    %v1602 = vshrl.u32 %v1601, 7
    %v1603 = vsub.s32 0, %v1602
    %v1604 = vrot.slane %v1571, %v1603
    %v1606 = vmul.f32 %v1598, %v1604
    %v1607 = vmul.f32 %v1599, %v1604
    %v1609 = vlaneseq
    %v1610 = vshrl.u32 %v1609, 7
    %v1611 = vsub.s32 0, %v1610
    %v1612 = vrot.slane %v1573, %v1611
    %v1614 = vadd.f32 %v1606, %v1612
    %v1615 = vadd.f32 %v1607, %v1612
    %v1616 = vpack.c.bf16 %v1615, %v1614
    %s1617 = scalar_lea.vmem %s15, 16
    %v1618 = vld [vmem:[%s1617] sm:$0xf]
    %v1619 = vld [vmem:[%s1617 + $0x4] sm:$0xf]
    %v1620 = vld [vmem:[%s1617 + $0x8] sm:$0xf]
    %v1621 = vld [vmem:[%s1617 + $0xc] sm:$0xf]
    %s1622 = scalar_lea.vmem %s16, 1
    %v1623 = vld [vmem:[%s1622] sm:$0x1]
    %v1625 = vlaneseq
    %v1626 = vshrl.u32 %v1625, 7
    %v1627 = vsub.s32 0, %v1626
    %v1628 = vrot.slane %v1623, %v1627
    %v1634 = vunpack.c.l.b16 %v1618
    %v1635 = vunpack.c.l.b16 %v1619
    %v1636 = vunpack.c.l.b16 %v1620
    %v1637 = vunpack.c.l.b16 %v1621
    %v1638 = vpack.c.b16 %v1635, %v1634
    %v1639 = vpack.c.b16 %v1637, %v1636
    %v1643 = vsel %vm90, %v1616, 0
    %1645 = vmatprep.subr.bf16.mxu0 0
    %1646 = vmatpush1.bf16.msra.mxu0 0
    %1647 = vmatprep.subr.bf16.mxu0 0
    %1648 = vmatpush1.bf16.msra.mxu0 0
    %1649 = vmatprep.subr.bf16.mxu0 0
    %1650 = vmatpush1.bf16.msra.mxu0 0
    %1651 = vmatprep.subr.bf16.mxu0 0
    %1652 = vmatpush1.bf16.msra.mxu0 0
    %1653 = vmatprep.subr.bf16.mxu0 0
    %1654 = vmatpush1.bf16.msra.mxu0 0
    %1655 = vmatprep.subr.bf16.mxu0 0
    %1656 = vmatpush1.bf16.msra.mxu0 0
    %1657 = vmatprep.subr.bf16.mxu0 0
    %1658 = vmatpush1.bf16.msra.mxu0 %v1639
    %1659 = vmatprep.subr.bf16.mxu0 0
    %1660 = vmatpush1.bf16.msra.mxu0 %v1638
    %1661 = vmatprep.subr.bf16.mxu0 0
    %1662 = vmatpush2.bf16.msra.mxu0 0
    %1663 = vmatprep.subr.bf16.mxu0 0
    %1664 = vmatpush2.bf16.msra.mxu0 0
    %1665 = vmatprep.subr.bf16.mxu0 0
    %1666 = vmatpush2.bf16.msra.mxu0 0
    %1667 = vmatprep.subr.bf16.mxu0 0
    %1668 = vmatpush2.bf16.msra.mxu0 0
    %1669 = vmatprep.subr.bf16.mxu0 0
    %1670 = vmatpush2.bf16.msra.mxu0 0
    %1671 = vmatprep.subr.bf16.mxu0 0
    %1672 = vmatpush2.bf16.msra.mxu0 0
    %1673 = vmatprep.subr.bf16.mxu0 0
    %1674 = vmatpush2.bf16.msra.mxu0 0
    %1675 = vmatprep.subr.bf16.mxu0 0
    %1676 = vmatpush2.bf16.msra.mxu0 0
    %1677 = vmatprep.mubr.bf16.mxu0 0
    %1678 = vmatmul.mubr.bf16.gmra.mxu0 %v1643
    %v1679 = vpop.f32.mrf.mxu0
    %v1680 = vadd.f32 %v1628, %v1679
    %v1681 = vpop.f32.mrf.mxu0
    %v1682 = vpop.f32.mrf.mxu0
    %v1683 = vadd.f32 %v1628, %v1682
    %v1684 = vpop.f32.mrf.mxu0
    %1685 = vdwg.mxu0
    %v1686 = vmul.f32 %v1680, %v1680
    %v1687 = vmul.f32 %v1683, %v1683
    %v1688 = vmul.f32 %v1680, %v1686
    %v1689 = vmul.f32 %v1683, %v1687
    %v1690 = vmul.f32 %v1688, 0.044715
    %v1691 = vmul.f32 %v1689, 0.044715
    %v1692 = vadd.f32 %v1680, %v1690
    %v1693 = vadd.f32 %v1683, %v1691
    %v1694 = vmul.f32 %v1692, 0.7978846
    %v1695 = vmul.f32 %v1693, 0.7978846
    %v1696 = vtanh.pop %v1694
    %v1697 = vtanh.pop %v1695
    %v1698 = vadd.f32 %v1696, 1.0
    %v1699 = vadd.f32 %v1697, 1.0
    %v1700 = vmul.f32 %v1698, 0.5
    %v1701 = vmul.f32 %v1699, 0.5
    %v1702 = vmul.f32 %v1680, %v1700
    %v1703 = vmul.f32 %v1683, %v1701
    %v1704 = vpack.c.bf16 %v1703, %v1702
    %s1705 = scalar_lea.vmem %s17, 32
    %v1706 = vld [vmem:[%s1705] sm:$0xf]
    %v1707 = vld [vmem:[%s1705 + $0x4] sm:$0xf]
    %v1708 = vld [vmem:[%s1705 + $0x8] sm:$0xf]
    %v1709 = vld [vmem:[%s1705 + $0xc] sm:$0xf]
    %v1710 = vld [vmem:[%s1705 + $0x10] sm:$0xf]
    %v1711 = vld [vmem:[%s1705 + $0x14] sm:$0xf]
    %v1712 = vld [vmem:[%s1705 + $0x18] sm:$0xf]
    %v1713 = vld [vmem:[%s1705 + $0x1c] sm:$0xf]
    %s1714 = scalar_lea.vmem %s18, 1
    %v1715 = vld [vmem:[%s1714] sm:$0x1]
    %v1717 = vlaneseq
    %v1718 = vshrl.u32 %v1717, 7
    %v1719 = vsub.s32 0, %v1718
    %v1720 = vrot.slane %v1715, %v1719
    %v1730 = vunpack.c.l.b16 %v1706
    %v1731 = vunpack.c.l.b16 %v1707
    %v1732 = vunpack.c.l.b16 %v1708
    %v1733 = vunpack.c.l.b16 %v1709
    %v1734 = vunpack.c.l.b16 %v1710
    %v1735 = vunpack.c.l.b16 %v1711
    %v1736 = vunpack.c.l.b16 %v1712
    %v1737 = vunpack.c.l.b16 %v1713
    %v1738 = vpack.c.b16 %v1731, %v1730
    %v1739 = vpack.c.b16 %v1733, %v1732
    %v1740 = vpack.c.b16 %v1735, %v1734
    %v1741 = vpack.c.b16 %v1737, %v1736
    %v1747 = vsel %vm888, %v1704, 0
    %1749 = vmatprep.subr.bf16.mxu0 0
    %1750 = vmatpush1.bf16.msra.mxu0 0
    %1751 = vmatprep.subr.bf16.mxu0 0
    %1752 = vmatpush1.bf16.msra.mxu0 0
    %1753 = vmatprep.subr.bf16.mxu0 0
    %1754 = vmatpush1.bf16.msra.mxu0 0
    %1755 = vmatprep.subr.bf16.mxu0 0
    %1756 = vmatpush1.bf16.msra.mxu0 0
    %1757 = vmatprep.subr.bf16.mxu0 0
    %1758 = vmatpush1.bf16.msra.mxu0 %v1741
    %1759 = vmatprep.subr.bf16.mxu0 0
    %1760 = vmatpush1.bf16.msra.mxu0 %v1740
    %1761 = vmatprep.subr.bf16.mxu0 0
    %1762 = vmatpush1.bf16.msra.mxu0 %v1739
    %1763 = vmatprep.subr.bf16.mxu0 0
    %1764 = vmatpush1.bf16.msra.mxu0 %v1738
    %1765 = vmatprep.subr.bf16.mxu0 0
    %1766 = vmatpush2.bf16.msra.mxu0 0
    %1767 = vmatprep.subr.bf16.mxu0 0
    %1768 = vmatpush2.bf16.msra.mxu0 0
    %1769 = vmatprep.subr.bf16.mxu0 0
    %1770 = vmatpush2.bf16.msra.mxu0 0
    %1771 = vmatprep.subr.bf16.mxu0 0
    %1772 = vmatpush2.bf16.msra.mxu0 0
    %1773 = vmatprep.subr.bf16.mxu0 0
    %1774 = vmatpush2.bf16.msra.mxu0 0
    %1775 = vmatprep.subr.bf16.mxu0 0
    %1776 = vmatpush2.bf16.msra.mxu0 0
    %1777 = vmatprep.subr.bf16.mxu0 0
    %1778 = vmatpush2.bf16.msra.mxu0 0
    %1779 = vmatprep.subr.bf16.mxu0 0
    %1780 = vmatpush2.bf16.msra.mxu0 0
    %1781 = vmatprep.mubr.bf16.mxu0 0
    %1782 = vmatmul.mubr.bf16.gmra.mxu0 %v1747
    %v1783 = vpop.f32.mrf.mxu0
    %v1784 = vadd.f32 %v1720, %v1783
    %v1785 = vpop.f32.mrf.mxu0
    %v1786 = vpop.f32.mrf.mxu0
    %v1787 = vadd.f32 %v1720, %v1786
    %v1788 = vpop.f32.mrf.mxu0
    %1789 = vdwg.mxu0
    %v1790 = vadd.f32 %v1784, %v1614
    %v1791 = vadd.f32 %v1787, %v1615
    %s1792 = scalar_lea.vmem %s19, 1
    %v1793 = vld [vmem:[%s1792] sm:$0x1]
    %s1794 = scalar_lea.vmem %s20, 1
    %v1795 = vld [vmem:[%s1794] sm:$0x1]
    %v1796 = vsel %vm90, %v1790, 0.0
    %1797 = vadd.xlane.f32.xlu0 %v1796
    %v1798 = vpop.xlane.xlu0 %1797
    %v1799 = vsel %vm90, %v1791, 0.0
    %1800 = vadd.xlane.f32.xlu0 %v1799
    %v1801 = vpop.xlane.xlu0 %1800
    %v1802 = vmul.f32 %v1798, %v97
    %v1803 = vmul.f32 %v1801, %v97
    %v1804 = vsub.f32 %v1790, %v1802
    %v1805 = vsub.f32 %v1791, %v1803
    %v1806 = vmul.f32 %v1804, %v1804
    %v1807 = vmul.f32 %v1805, %v1805
    %v1808 = vsel %vm90, %v1806, 0.0
    %1809 = vadd.xlane.f32.xlu0 %v1808
    %v1810 = vpop.xlane.xlu0 %1809
    %v1811 = vsel %vm90, %v1807, 0.0
    %1812 = vadd.xlane.f32.xlu0 %v1811
    %v1813 = vpop.xlane.xlu0 %1812
    %v1814 = vmul.f32 %v1810, %v97
    %v1815 = vmul.f32 %v1813, %v97
    %v1816 = vadd.f32 %v1814, 1e-05
    %v1817 = vadd.f32 %v1815, 1e-05
    %v1818 = vrsqrt.pop %v1816
    %v1819 = vrsqrt.pop %v1817
    %v1820 = vmul.f32 %v1804, %v1818
    %v1821 = vmul.f32 %v1805, %v1819
    %v1823 = vlaneseq
    %v1824 = vshrl.u32 %v1823, 7
    %v1825 = vsub.s32 0, %v1824
    %v1826 = vrot.slane %v1793, %v1825
    %v1828 = vmul.f32 %v1820, %v1826
    %v1829 = vmul.f32 %v1821, %v1826
    %v1831 = vlaneseq
    %v1832 = vshrl.u32 %v1831, 7
    %v1833 = vsub.s32 0, %v1832
    %v1834 = vrot.slane %v1795, %v1833
    %v1836 = vadd.f32 %v1828, %v1834
    %v1837 = vadd.f32 %v1829, %v1834
    %1838 = vst.msk [vmem:[#allocation2] sm:$0xff] %vm90, %v1836
    %1839 = vst.msk [vmem:[#allocation2 + $0x8] sm:$0xff] %vm90, %v1837
    // Predicated region
    $region86: #{bert_forward.1} parent=1 // pred_check
      _
    $region87: #{bert_forward.1} parent=1 // pred_check_branch
      %1841 = sbr.rel (0) target = $region89
    $region88: #{bert_forward.1} parent=1 // pred_region
      %s1843 = ssub.s32 256, 256
      %1844 = vsyncadd [#allocation3], %s1843
      %s1845 = sshll.u32 [#allocation2], 4
      %s1846 = int_to_ptr.vmem [resolvable:$true] %s1845
      %1851 = dma.vmem_to_hbm [thread:$0]  %s1846, 256, %s21, [#allocation3], 128, 128, 8
    $region89: #{bert_forward.1} parent=1 // pred_fallthru
      _
    // Predicated region
    $region90: #{bert_forward.1} parent=1 // pred_check
      _
    $region91: #{bert_forward.1} parent=1 // pred_check_branch
      %1853 = sbr.rel (0) target = $region93
    $region92: #{bert_forward.1} parent=1 // pred_region
      %1854 = dma.done [#allocation3], 256
    $region93: #{bert_forward.1} parent=1 // pred_fallthru
      _
    %1855 = vsyncpa [#allocation3], 1

</llo_original>
